<compile_context>
chip_gen: v5e
topology: v5e:2x2
jax: 0.10.0
libtpu: 0.0.40
codegen_flags: <defaults>
</compile_context>

<pallas_src>
import functools

import jax
import jax.numpy as jnp
from jax.experimental import pallas as pl
from jax.experimental.pallas import tpu as pltpu

EPS = 1e-5  # nn.LayerNorm default eps


def _layernorm(x, w, b):
    mu = jnp.mean(x, axis=-1, keepdims=True)
    var = jnp.mean((x - mu) ** 2, axis=-1, keepdims=True)
    return (x - mu) * jax.lax.rsqrt(var + EPS) * w + b


# ---------------------------------------------------------------------------
# Fused CLIP encoder kernel, grid = (batch, layer).
#   l == 0        : act = tok_emb + pos_emb
#   every l       : act = act + Attn(LN_pre(act)); act = act + MLP(LN_post(act))
#   l == L - 1    : out = LN_final(act)
# ---------------------------------------------------------------------------
def clip_encoder_kernel(num_heads,
                        x_ref, pos_ref,
                        ln1w_ref, ln1b_ref,
                        wqkv_ref, bqkv_ref,
                        wo_ref, bo_ref,
                        ln2w_ref, ln2b_ref,
                        w1_ref, b1_ref, w2_ref, b2_ref,
                        finw_ref, finb_ref,
                        out_ref, act_ref):
    l = pl.program_id(1)
    S, D = act_ref.shape
    H = num_heads
    Dh = D // H
    bf16 = jnp.bfloat16

    # ---- first layer: fuse position-embedding add into the kernel ----------
    @pl.when(l == 0)
    def _():
        act_ref[...] = x_ref[...].astype(jnp.float32) + pos_ref[...]

    x = act_ref[...]                                    # (S, D) f32, VMEM-resident

    # ---- self-attention block ----------------------------------------------
    h = _layernorm(x, ln1w_ref[...], ln1b_ref[...]).astype(bf16)
    # Single lane-dense fused QKV projection (scale already folded into q cols).
    qkv = jnp.dot(h, wqkv_ref[...],
                  preferred_element_type=jnp.float32) + bqkv_ref[...]   # (S, 3D)
    q = qkv[:, :D]
    k = qkv[:, D:2 * D]
    v = qkv[:, 2 * D:]

    # Split heads only for the (H,S,S) score / context einsums.
    def to_heads(t):
        return jnp.stack([t[:, i * Dh:(i + 1) * Dh] for i in range(H)],
                         axis=0).astype(bf16)           # (H, S, Dh)

    qh = to_heads(q)
    kh = to_heads(k)
    vh = to_heads(v)

    s = jnp.einsum('hqe,hke->hqk', qh, kh,
                   preferred_element_type=jnp.float32)  # (H, S, S)
    # TODO(synk): the provided SelfAttention spec applies no causal / padding
    # mask, so full bidirectional attention is computed here (differs from
    # HuggingFace CLIPTextModel, which is causal).
    s = s - jnp.max(s, axis=-1, keepdims=True)          # stable softmax (f32)
    p = jnp.exp(s)
    p = p * pl.reciprocal(jnp.sum(p, axis=-1, keepdims=True), approx=True)

    ctx = jnp.einsum('hqk,hke->hqe', p.astype(bf16), vh,
                     preferred_element_type=jnp.float32)          # (H, S, Dh)
    # Re-pack heads along the lane dim -> one fused (S,D)x(D,D) output matmul.
    ctx_cat = jnp.concatenate([ctx[i] for i in range(H)], axis=-1)  # (S, D)
    attn = jnp.dot(ctx_cat.astype(bf16), wo_ref[...],
                   preferred_element_type=jnp.float32) + bo_ref[...]
    x = x + attn

    # ---- feed-forward block (QuickGELU: a * sigmoid(1.702 * a)) ------------
    # TODO(synk): for full-size CLIP on v7x (64 MiB VMEM) stream the 4D hidden
    # dim (tile w1 columns / w2 rows) instead of keeping full w1/w2 resident.
    h2 = _layernorm(x, ln2w_ref[...], ln2b_ref[...]).astype(bf16)
    a = jnp.dot(h2, w1_ref[...],
                preferred_element_type=jnp.float32) + b1_ref[...]
    a = a * jax.nn.sigmoid(1.702 * a)
    m = jnp.dot(a.astype(bf16), w2_ref[...],
                preferred_element_type=jnp.float32) + b2_ref[...]
    x = x + m

    act_ref[...] = x                                    # carry to next layer

    # ---- last layer: fuse final LayerNorm -----------------------------------
    @pl.when(l == pl.num_programs(1) - 1)
    def _():
        out_ref[...] = _layernorm(x, finw_ref[...], finb_ref[...]).astype(out_ref.dtype)


# ---------------------------------------------------------------------------
# Full model forward
# ---------------------------------------------------------------------------
def clip_forward(tokens, params, num_heads):
    tokens = tokens.astype(jnp.int32)                       # tokens.type(torch.long)
    tok_emb = jnp.take(params['token_embedding'], tokens, axis=0)   # (B, S, D)
    B, S = tokens.shape
    D = params['token_embedding'].shape[1]
    H = num_heads
    assert D % H == 0
    Dh = D // H
    F = params['layers'][0]['w1'].shape[1]
    L = len(params['layers'])
    bf16 = jnp.bfloat16
    scale = 1.0 / (Dh ** 0.5)

    pos = params['position_embedding'][:S, :]

    # --- stack per-layer weights into (L, ...) arrays (plain JAX, outside) ---
    def stack(fn):
        return jnp.stack([fn(lp) for lp in params['layers']], axis=0)

    # Fused Wq|Wk|Wv with the 1/sqrt(Dh) scale folded into the q columns/bias.
    wqkv = stack(lambda lp: jnp.concatenate(
        [lp['wq'] * scale, lp['wk'], lp['wv']], axis=1).astype(bf16))        # (L, D, 3D)
    bqkv = stack(lambda lp: jnp.concatenate(
        [lp['bq'] * scale, lp['bk'], lp['bv']], axis=0).reshape(1, 3 * D))   # (L, 1, 3D)
    wo = stack(lambda lp: lp['wo'].astype(bf16))                             # (L, D, D)
    bo = stack(lambda lp: lp['bo'].reshape(1, D))
    ln1w = stack(lambda lp: lp['ln1_w'].reshape(1, D))
    ln1b = stack(lambda lp: lp['ln1_b'].reshape(1, D))
    ln2w = stack(lambda lp: lp['ln2_w'].reshape(1, D))
    ln2b = stack(lambda lp: lp['ln2_b'].reshape(1, D))
    w1 = stack(lambda lp: lp['w1'].astype(bf16))                             # (L, D, F)
    b1 = stack(lambda lp: lp['b1'].reshape(1, F))
    w2 = stack(lambda lp: lp['w2'].astype(bf16))                             # (L, F, D)
    b2 = stack(lambda lp: lp['b2'].reshape(1, D))
    finw = params['final_ln_w'].reshape(1, D)
    finb = params['final_ln_b'].reshape(1, D)

    # Layer-indexed specs: block changes with l -> double-buffered, so layer
    # l+1's weight DMA overlaps layer l's compute.
    def layer_spec(*trailing):
        return pl.BlockSpec(
            (None,) + trailing,
            lambda b, l, _n=len(trailing): (l,) + (0,) * _n)

    # Constant specs: fetched once, VMEM-resident across the whole grid.
    def const_spec(shape):
        return pl.BlockSpec(shape, lambda b, l, _n=len(shape): (0,) * _n)

    kernel = functools.partial(clip_encoder_kernel, H)

    # VMEM budget: double-buffered bf16 weights of one layer + f32 activations.
    wbytes_layer = 2 * (D * 3 * D + D * D + 2 * D * F)
    act_bytes = 4 * S * (8 * D + F) + 4 * H * S * S * 3
    vmem_limit = int(min(96 * 2 ** 20,
                         max(32 * 2 ** 20, 2 * wbytes_layer + 2 * act_bytes + (4 << 20))))
    # TODO(synk): per-generation cap (v7x has only 64 MiB physical VMEM) +
    # MLP-weight streaming would be needed for full-size CLIP on v7x.

    return pl.pallas_call(
        kernel,
        out_shape=jax.ShapeDtypeStruct((B, S, D), jnp.float32),
        grid=(B, L),
        in_specs=[
            pl.BlockSpec((None, S, D), lambda b, l: (b, 0, 0)),   # tok_emb (per-batch)
            const_spec((S, D)),                                   # pos emb
            layer_spec(1, D), layer_spec(1, D),                   # ln1 w, b
            layer_spec(D, 3 * D), layer_spec(1, 3 * D),           # fused Wqkv, bqkv
            layer_spec(D, D), layer_spec(1, D),                   # wo, bo
            layer_spec(1, D), layer_spec(1, D),                   # ln2 w, b
            layer_spec(D, F), layer_spec(1, F),                   # w1, b1
            layer_spec(F, D), layer_spec(1, D),                   # w2, b2
            const_spec((1, D)), const_spec((1, D)),               # final LN w, b
        ],
        out_specs=pl.BlockSpec((None, S, D), lambda b, l: (b, 0, 0)),
        scratch_shapes=[pltpu.VMEM((S, D), jnp.float32)],         # activation carry
        compiler_params=pltpu.CompilerParams(
            dimension_semantics=("parallel", "arbitrary"),
            vmem_limit_bytes=vmem_limit,
        ),
    )(tok_emb, pos,
      ln1w, ln1b, wqkv, bqkv, wo, bo, ln2w, ln2b,
      w1, b1, w2, b2, finw, finb)


# ---------------------------------------------------------------------------
# Deterministic parameter construction (same shapes as the PyTorch module,
# scaled-down hyperparameters).
# ---------------------------------------------------------------------------
def init_params(key, vocab_size, embedding_dim, max_seq_length, num_layers):
    D = embedding_dim

    def nrm(k, shape, scale=0.02):
        return (scale * jax.random.normal(k, shape)).astype(jnp.float32)

    keys = jax.random.split(key, 2 + num_layers)
    params = {
        'token_embedding': nrm(keys[0], (vocab_size, D)),
        'position_embedding': nrm(keys[1], (max_seq_length, D)),
        'final_ln_w': jnp.ones((D,), jnp.float32),
        'final_ln_b': jnp.zeros((D,), jnp.float32),
        'layers': [],
    }
    for li in range(num_layers):
        lk = jax.random.split(keys[2 + li], 6)
        params['layers'].append({
            'ln1_w': jnp.ones((D,), jnp.float32),
            'ln1_b': jnp.zeros((D,), jnp.float32),
            'wq': nrm(lk[0], (D, D)), 'bq': jnp.zeros((D,), jnp.float32),
            'wk': nrm(lk[1], (D, D)), 'bk': jnp.zeros((D,), jnp.float32),
            'wv': nrm(lk[2], (D, D)), 'bv': jnp.zeros((D,), jnp.float32),
            'wo': nrm(lk[3], (D, D)), 'bo': jnp.zeros((D,), jnp.float32),
            'ln2_w': jnp.ones((D,), jnp.float32),
            'ln2_b': jnp.zeros((D,), jnp.float32),
            'w1': nrm(lk[4], (D, 4 * D)), 'b1': jnp.zeros((4 * D,), jnp.float32),
            'w2': nrm(lk[5], (4 * D, D)), 'b2': jnp.zeros((D,), jnp.float32),
        })
    return params


if __name__ == "__main__":
    # Small hyperparameters consistent with the module's constructor shapes.
    # D=128 keeps the feature (lane) dimension dense on TPU.
    VOCAB, D, MAX_S, LAYERS, HEADS = 100, 128, 16, 2, 4
    B, S = 2, 8

    root = jax.random.PRNGKey(0)
    pkey, tkey = jax.random.split(root)
    params = init_params(pkey, VOCAB, D, MAX_S, LAYERS)
    tokens = jax.random.randint(tkey, (B, S), 0, VOCAB, dtype=jnp.int32)

    fwd = jax.jit(functools.partial(clip_forward, num_heads=HEADS))
    out = fwd(tokens, params)
    jax.block_until_ready(out)
    assert out.shape == (B, S, D) and out.dtype == jnp.float32
    print("KERNEL_OK")
</pallas_src>

<mosaic_0001>
module attributes {stable_mosaic.version = 11 : i64} {
  func.func @clip_encoder_kernel(%arg0: i32, %arg1: i32, %arg2: memref<1x8x128xf32, #tpu.memory_space<vmem>>, %arg3: memref<8x128xf32, #tpu.memory_space<vmem>>, %arg4: memref<1x1x128xf32, #tpu.memory_space<vmem>>, %arg5: memref<1x1x128xf32, #tpu.memory_space<vmem>>, %arg6: memref<1x128x384xbf16, #tpu.memory_space<vmem>>, %arg7: memref<1x1x384xf32, #tpu.memory_space<vmem>>, %arg8: memref<1x128x128xbf16, #tpu.memory_space<vmem>>, %arg9: memref<1x1x128xf32, #tpu.memory_space<vmem>>, %arg10: memref<1x1x128xf32, #tpu.memory_space<vmem>>, %arg11: memref<1x1x128xf32, #tpu.memory_space<vmem>>, %arg12: memref<1x128x512xbf16, #tpu.memory_space<vmem>>, %arg13: memref<1x1x512xf32, #tpu.memory_space<vmem>>, %arg14: memref<1x512x128xbf16, #tpu.memory_space<vmem>>, %arg15: memref<1x1x128xf32, #tpu.memory_space<vmem>>, %arg16: memref<1x128xf32, #tpu.memory_space<vmem>>, %arg17: memref<1x128xf32, #tpu.memory_space<vmem>>, %arg18: memref<1x8x128xf32, #tpu.memory_space<vmem>>, %arg19: memref<8x128xf32, #tpu.memory_space<vmem>>) attributes {dimension_semantics = [#tpu.dimension_semantics<parallel>, #tpu.dimension_semantics<arbitrary>], iteration_bounds = array<i64: 2, 2>, scalar_prefetch = 0 : i64, scratch_operands = 1 : i64, tpu.core_type = #tpu.core_type<tc>, window_params = [{transform_indices = @transform_0, window_bounds = array<i64: 1, 8, 128>}, {pipeline_mode = #tpu.pipeline_mode<synchronous>, transform_indices = @transform_1, window_bounds = array<i64: 8, 128>}, {transform_indices = @transform_2, window_bounds = array<i64: 1, 1, 128>}, {transform_indices = @transform_3, window_bounds = array<i64: 1, 1, 128>}, {transform_indices = @transform_4, window_bounds = array<i64: 1, 128, 384>}, {transform_indices = @transform_5, window_bounds = array<i64: 1, 1, 384>}, {transform_indices = @transform_6, window_bounds = array<i64: 1, 128, 128>}, {transform_indices = @transform_7, window_bounds = array<i64: 1, 1, 128>}, {transform_indices = @transform_8, window_bounds = array<i64: 1, 1, 128>}, {transform_indices = @transform_9, window_bounds = array<i64: 1, 1, 128>}, {transform_indices = @transform_10, window_bounds = array<i64: 1, 128, 512>}, {transform_indices = @transform_11, window_bounds = array<i64: 1, 1, 512>}, {transform_indices = @transform_12, window_bounds = array<i64: 1, 512, 128>}, {transform_indices = @transform_13, window_bounds = array<i64: 1, 1, 128>}, {pipeline_mode = #tpu.pipeline_mode<synchronous>, transform_indices = @transform_14, window_bounds = array<i64: 1, 128>}, {pipeline_mode = #tpu.pipeline_mode<synchronous>, transform_indices = @transform_15, window_bounds = array<i64: 1, 128>}, {transform_indices = @transform_16, window_bounds = array<i64: 1, 8, 128>}]} {
    %c0_i32 = arith.constant 0 : i32
    %0 = arith.cmpi eq, %arg1, %c0_i32 : i32
    %1 = arith.extui %0 : i1 to i32
    %c0_i32_0 = arith.constant 0 : i32
    %2 = arith.cmpi ne, %1, %c0_i32_0 : i32
    scf.if %2 {
      %c0_60 = arith.constant 0 : index
      %c0_61 = arith.constant 0 : index
      %c0_62 = arith.constant 0 : index
      %157 = vector.load %arg2[%c0_60, %c0_61, %c0_62] : memref<1x8x128xf32, #tpu.memory_space<vmem>>, vector<1x8x128xf32>
      %158 = vector.shape_cast %157 : vector<1x8x128xf32> to vector<8x128xf32>
      %c0_63 = arith.constant 0 : index
      %c0_64 = arith.constant 0 : index
      %159 = vector.load %arg3[%c0_63, %c0_64] : memref<8x128xf32, #tpu.memory_space<vmem>>, vector<8x128xf32>
      %160 = arith.addf %158, %159 : vector<8x128xf32>
      %c0_65 = arith.constant 0 : index
      %c0_66 = arith.constant 0 : index
      %161 = vector.load %arg19[%c0_65, %c0_66] : memref<8x128xf32, #tpu.memory_space<vmem>>, vector<8x128xf32>
      tpu.vector_store %arg19[%c0_65, %c0_66], %160 {strides = array<i32>} : memref<8x128xf32, #tpu.memory_space<vmem>>, vector<8x128xf32>,
    } else {
    }
    %c0 = arith.constant 0 : index
    %c0_1 = arith.constant 0 : index
    %3 = vector.load %arg19[%c0, %c0_1] : memref<8x128xf32, #tpu.memory_space<vmem>>, vector<8x128xf32>
    %c0_2 = arith.constant 0 : index
    %c0_3 = arith.constant 0 : index
    %c0_4 = arith.constant 0 : index
    %4 = vector.load %arg4[%c0_2, %c0_3, %c0_4] : memref<1x1x128xf32, #tpu.memory_space<vmem>>, vector<1x1x128xf32>
    %5 = vector.shape_cast %4 : vector<1x1x128xf32> to vector<1x128xf32>
    %c0_5 = arith.constant 0 : index
    %c0_6 = arith.constant 0 : index
    %c0_7 = arith.constant 0 : index
    %6 = vector.load %arg5[%c0_5, %c0_6, %c0_7] : memref<1x1x128xf32, #tpu.memory_space<vmem>>, vector<1x1x128xf32>
    %7 = vector.shape_cast %6 : vector<1x1x128xf32> to vector<1x128xf32>
    %cst = arith.constant dense<0.000000e+00> : vector<8xf32>
    %8 = vector.multi_reduction <add>, %3, %cst [1] : vector<8x128xf32> to vector<8xf32>
    %9 = vector.shape_cast %8 : vector<8xf32> to vector<8x1xf32>
    %cst_8 = arith.constant 1.280000e+02 : f32
    %10 = vector.broadcast %cst_8 : f32 to vector<8x1xf32>
    %11 = arith.divf %9, %10 : vector<8x1xf32>
    %12 = vector.broadcast %11 : vector<8x1xf32> to vector<8x128xf32>
    %13 = arith.subf %3, %12 : vector<8x128xf32>
    %14 = arith.mulf %13, %13 : vector<8x128xf32>
    %cst_9 = arith.constant dense<0.000000e+00> : vector<8xf32>
    %15 = vector.multi_reduction <add>, %14, %cst_9 [1] : vector<8x128xf32> to vector<8xf32>
    %16 = vector.shape_cast %15 : vector<8xf32> to vector<8x1xf32>
    %cst_10 = arith.constant 1.280000e+02 : f32
    %17 = vector.broadcast %cst_10 : f32 to vector<8x1xf32>
    %18 = arith.divf %16, %17 : vector<8x1xf32>
    %19 = vector.broadcast %11 : vector<8x1xf32> to vector<8x128xf32>
    %20 = arith.subf %3, %19 : vector<8x128xf32>
    %cst_11 = arith.constant 9.99999974E-6 : f32
    %21 = vector.broadcast %cst_11 : f32 to vector<8x1xf32>
    %22 = arith.addf %18, %21 : vector<8x1xf32>
    %23 = math.rsqrt %22 : vector<8x1xf32>
    %24 = vector.broadcast %23 : vector<8x1xf32> to vector<8x128xf32>
    %25 = arith.mulf %20, %24 : vector<8x128xf32>
    %26 = vector.broadcast %5 : vector<1x128xf32> to vector<8x128xf32>
    %27 = arith.mulf %25, %26 : vector<8x128xf32>
    %28 = vector.broadcast %7 : vector<1x128xf32> to vector<8x128xf32>
    %29 = arith.addf %27, %28 : vector<8x128xf32>
    %30 = arith.truncf %29 : vector<8x128xf32> to vector<8x128xbf16>
    %c0_12 = arith.constant 0 : index
    %c0_13 = arith.constant 0 : index
    %c0_14 = arith.constant 0 : index
    %31 = vector.load %arg6[%c0_12, %c0_13, %c0_14] : memref<1x128x384xbf16, #tpu.memory_space<vmem>>, vector<1x128x384xbf16>
    %32 = vector.shape_cast %31 : vector<1x128x384xbf16> to vector<128x384xbf16>
    %cst_15 = arith.constant dense<0.000000e+00> : vector<8x384xf32>
    %33 = tpu.matmul %30, %32, %cst_15 {dimension_numbers = #tpu.dot_dimension_numbers<[1], [0], [0], [1], [0, 0, 1, 1], [], []>} : vector<8x128xbf16>, vector<128x384xbf16>, vector<8x384xf32> -> vector<8x384xf32>
    %c0_16 = arith.constant 0 : index
    %c0_17 = arith.constant 0 : index
    %c0_18 = arith.constant 0 : index
    %34 = vector.load %arg7[%c0_16, %c0_17, %c0_18] : memref<1x1x384xf32, #tpu.memory_space<vmem>>, vector<1x1x384xf32>
    %35 = vector.shape_cast %34 : vector<1x1x384xf32> to vector<1x384xf32>
    %36 = vector.broadcast %35 : vector<1x384xf32> to vector<8x384xf32>
    %37 = arith.addf %33, %36 : vector<8x384xf32>
    %38 = vector.extract_strided_slice %37 {offsets = [0, 0], sizes = [8, 128], strides = [1, 1]} : vector<8x384xf32> to vector<8x128xf32>
    %39 = vector.extract_strided_slice %37 {offsets = [0, 128], sizes = [8, 128], strides = [1, 1]} : vector<8x384xf32> to vector<8x128xf32>
    %40 = vector.extract_strided_slice %37 {offsets = [0, 256], sizes = [8, 128], strides = [1, 1]} : vector<8x384xf32> to vector<8x128xf32>
    %41 = vector.extract_strided_slice %38 {offsets = [0, 0], sizes = [8, 32], strides = [1, 1]} : vector<8x128xf32> to vector<8x32xf32>
    %42 = vector.extract_strided_slice %38 {offsets = [0, 32], sizes = [8, 32], strides = [1, 1]} : vector<8x128xf32> to vector<8x32xf32>
    %43 = vector.extract_strided_slice %38 {offsets = [0, 64], sizes = [8, 32], strides = [1, 1]} : vector<8x128xf32> to vector<8x32xf32>
    %44 = vector.extract_strided_slice %38 {offsets = [0, 96], sizes = [8, 32], strides = [1, 1]} : vector<8x128xf32> to vector<8x32xf32>
    %45 = vector.shape_cast %41 : vector<8x32xf32> to vector<1x8x32xf32>
    %46 = vector.shape_cast %42 : vector<8x32xf32> to vector<1x8x32xf32>
    %47 = vector.shape_cast %43 : vector<8x32xf32> to vector<1x8x32xf32>
    %48 = vector.shape_cast %44 : vector<8x32xf32> to vector<1x8x32xf32>
    %49 = tpu.concatenate %45, %46, %47, %48 in 0 : vector<1x8x32xf32>, vector<1x8x32xf32>, vector<1x8x32xf32>, vector<1x8x32xf32> -> vector<4x8x32xf32>
    %50 = arith.truncf %49 : vector<4x8x32xf32> to vector<4x8x32xbf16>
    %51 = vector.extract_strided_slice %39 {offsets = [0, 0], sizes = [8, 32], strides = [1, 1]} : vector<8x128xf32> to vector<8x32xf32>
    %52 = vector.extract_strided_slice %39 {offsets = [0, 32], sizes = [8, 32], strides = [1, 1]} : vector<8x128xf32> to vector<8x32xf32>
    %53 = vector.extract_strided_slice %39 {offsets = [0, 64], sizes = [8, 32], strides = [1, 1]} : vector<8x128xf32> to vector<8x32xf32>
    %54 = vector.extract_strided_slice %39 {offsets = [0, 96], sizes = [8, 32], strides = [1, 1]} : vector<8x128xf32> to vector<8x32xf32>
    %55 = vector.shape_cast %51 : vector<8x32xf32> to vector<1x8x32xf32>
    %56 = vector.shape_cast %52 : vector<8x32xf32> to vector<1x8x32xf32>
    %57 = vector.shape_cast %53 : vector<8x32xf32> to vector<1x8x32xf32>
    %58 = vector.shape_cast %54 : vector<8x32xf32> to vector<1x8x32xf32>
    %59 = tpu.concatenate %55, %56, %57, %58 in 0 : vector<1x8x32xf32>, vector<1x8x32xf32>, vector<1x8x32xf32>, vector<1x8x32xf32> -> vector<4x8x32xf32>
    %60 = arith.truncf %59 : vector<4x8x32xf32> to vector<4x8x32xbf16>
    %61 = vector.extract_strided_slice %40 {offsets = [0, 0], sizes = [8, 32], strides = [1, 1]} : vector<8x128xf32> to vector<8x32xf32>
    %62 = vector.extract_strided_slice %40 {offsets = [0, 32], sizes = [8, 32], strides = [1, 1]} : vector<8x128xf32> to vector<8x32xf32>
    %63 = vector.extract_strided_slice %40 {offsets = [0, 64], sizes = [8, 32], strides = [1, 1]} : vector<8x128xf32> to vector<8x32xf32>
    %64 = vector.extract_strided_slice %40 {offsets = [0, 96], sizes = [8, 32], strides = [1, 1]} : vector<8x128xf32> to vector<8x32xf32>
    %65 = vector.shape_cast %61 : vector<8x32xf32> to vector<1x8x32xf32>
    %66 = vector.shape_cast %62 : vector<8x32xf32> to vector<1x8x32xf32>
    %67 = vector.shape_cast %63 : vector<8x32xf32> to vector<1x8x32xf32>
    %68 = vector.shape_cast %64 : vector<8x32xf32> to vector<1x8x32xf32>
    %69 = tpu.concatenate %65, %66, %67, %68 in 0 : vector<1x8x32xf32>, vector<1x8x32xf32>, vector<1x8x32xf32>, vector<1x8x32xf32> -> vector<4x8x32xf32>
    %70 = arith.truncf %69 : vector<4x8x32xf32> to vector<4x8x32xbf16>
    "tpu.trace_start"() <{level = 10 : i32, message = "hqe,hke->hqk"}> : () -> ()
    %cst_19 = arith.constant dense<0.000000e+00> : vector<4x8x8xf32>
    %71 = tpu.matmul %50, %60, %cst_19 {dimension_numbers = #tpu.dot_dimension_numbers<[2], [2], [1], [1], [0, 0, 0, 1, 1, 1], [0], [0]>} : vector<4x8x32xbf16>, vector<4x8x32xbf16>, vector<4x8x8xf32> -> vector<4x8x8xf32>
    "tpu.trace_stop"() : () -> ()
    %cst_20 = arith.constant dense<0xFF800000> : vector<4x8xf32>
    %72 = vector.multi_reduction <maximumf>, %71, %cst_20 [2] : vector<4x8x8xf32> to vector<4x8xf32>
    %73 = vector.shape_cast %72 : vector<4x8xf32> to vector<4x8x1xf32>
    %74 = vector.broadcast %73 : vector<4x8x1xf32> to vector<4x8x8xf32>
    %75 = arith.subf %71, %74 : vector<4x8x8xf32>
    %76 = math.exp %75 : vector<4x8x8xf32>
    %cst_21 = arith.constant dense<0.000000e+00> : vector<4x8xf32>
    %77 = vector.multi_reduction <add>, %76, %cst_21 [2] : vector<4x8x8xf32> to vector<4x8xf32>
    %78 = vector.shape_cast %77 : vector<4x8xf32> to vector<4x8x1xf32>
    %79 = tpu.reciprocal %78 {approx = true} : vector<4x8x1xf32> -> vector<4x8x1xf32>
    %80 = vector.broadcast %79 : vector<4x8x1xf32> to vector<4x8x8xf32>
    %81 = arith.mulf %76, %80 : vector<4x8x8xf32>
    %82 = arith.truncf %81 : vector<4x8x8xf32> to vector<4x8x8xbf16>
    "tpu.trace_start"() <{level = 10 : i32, message = "hqk,hke->hqe"}> : () -> ()
    %cst_22 = arith.constant dense<0.000000e+00> : vector<4x8x32xf32>
    %83 = tpu.matmul %82, %70, %cst_22 {dimension_numbers = #tpu.dot_dimension_numbers<[2], [1], [1], [2], [0, 0, 0, 1, 1, 2], [0], [0]>} : vector<4x8x8xbf16>, vector<4x8x32xbf16>, vector<4x8x32xf32> -> vector<4x8x32xf32>
    "tpu.trace_stop"() : () -> ()
    %84 = vector.extract_strided_slice %83 {offsets = [0, 0, 0], sizes = [1, 8, 32], strides = [1, 1, 1]} : vector<4x8x32xf32> to vector<1x8x32xf32>
    %85 = vector.shape_cast %84 : vector<1x8x32xf32> to vector<8x32xf32>
    %86 = vector.extract_strided_slice %83 {offsets = [1, 0, 0], sizes = [1, 8, 32], strides = [1, 1, 1]} : vector<4x8x32xf32> to vector<1x8x32xf32>
    %87 = vector.shape_cast %86 : vector<1x8x32xf32> to vector<8x32xf32>
    %88 = vector.extract_strided_slice %83 {offsets = [2, 0, 0], sizes = [1, 8, 32], strides = [1, 1, 1]} : vector<4x8x32xf32> to vector<1x8x32xf32>
    %89 = vector.shape_cast %88 : vector<1x8x32xf32> to vector<8x32xf32>
    %90 = vector.extract_strided_slice %83 {offsets = [3, 0, 0], sizes = [1, 8, 32], strides = [1, 1, 1]} : vector<4x8x32xf32> to vector<1x8x32xf32>
    %91 = vector.shape_cast %90 : vector<1x8x32xf32> to vector<8x32xf32>
    %92 = tpu.concatenate %85, %87, %89, %91 in 1 : vector<8x32xf32>, vector<8x32xf32>, vector<8x32xf32>, vector<8x32xf32> -> vector<8x128xf32>
    %93 = arith.truncf %92 : vector<8x128xf32> to vector<8x128xbf16>
    %c0_23 = arith.constant 0 : index
    %c0_24 = arith.constant 0 : index
    %c0_25 = arith.constant 0 : index
    %94 = vector.load %arg8[%c0_23, %c0_24, %c0_25] : memref<1x128x128xbf16, #tpu.memory_space<vmem>>, vector<1x128x128xbf16>
    %95 = vector.shape_cast %94 : vector<1x128x128xbf16> to vector<128x128xbf16>
    %cst_26 = arith.constant dense<0.000000e+00> : vector<8x128xf32>
    %96 = tpu.matmul %93, %95, %cst_26 {dimension_numbers = #tpu.dot_dimension_numbers<[1], [0], [0], [1], [0, 0, 1, 1], [], []>} : vector<8x128xbf16>, vector<128x128xbf16>, vector<8x128xf32> -> vector<8x128xf32>
    %c0_27 = arith.constant 0 : index
    %c0_28 = arith.constant 0 : index
    %c0_29 = arith.constant 0 : index
    %97 = vector.load %arg9[%c0_27, %c0_28, %c0_29] : memref<1x1x128xf32, #tpu.memory_space<vmem>>, vector<1x1x128xf32>
    %98 = vector.shape_cast %97 : vector<1x1x128xf32> to vector<1x128xf32>
    %99 = vector.broadcast %98 : vector<1x128xf32> to vector<8x128xf32>
    %100 = arith.addf %96, %99 : vector<8x128xf32>
    %101 = arith.addf %3, %100 : vector<8x128xf32>
    %c0_30 = arith.constant 0 : index
    %c0_31 = arith.constant 0 : index
    %c0_32 = arith.constant 0 : index
    %102 = vector.load %arg10[%c0_30, %c0_31, %c0_32] : memref<1x1x128xf32, #tpu.memory_space<vmem>>, vector<1x1x128xf32>
    %103 = vector.shape_cast %102 : vector<1x1x128xf32> to vector<1x128xf32>
    %c0_33 = arith.constant 0 : index
    %c0_34 = arith.constant 0 : index
    %c0_35 = arith.constant 0 : index
    %104 = vector.load %arg11[%c0_33, %c0_34, %c0_35] : memref<1x1x128xf32, #tpu.memory_space<vmem>>, vector<1x1x128xf32>
    %105 = vector.shape_cast %104 : vector<1x1x128xf32> to vector<1x128xf32>
    %cst_36 = arith.constant dense<0.000000e+00> : vector<8xf32>
    %106 = vector.multi_reduction <add>, %101, %cst_36 [1] : vector<8x128xf32> to vector<8xf32>
    %107 = vector.shape_cast %106 : vector<8xf32> to vector<8x1xf32>
    %cst_37 = arith.constant 1.280000e+02 : f32
    %108 = vector.broadcast %cst_37 : f32 to vector<8x1xf32>
    %109 = arith.divf %107, %108 : vector<8x1xf32>
    %110 = vector.broadcast %109 : vector<8x1xf32> to vector<8x128xf32>
    %111 = arith.subf %101, %110 : vector<8x128xf32>
    %112 = arith.mulf %111, %111 : vector<8x128xf32>
    %cst_38 = arith.constant dense<0.000000e+00> : vector<8xf32>
    %113 = vector.multi_reduction <add>, %112, %cst_38 [1] : vector<8x128xf32> to vector<8xf32>
    %114 = vector.shape_cast %113 : vector<8xf32> to vector<8x1xf32>
    %cst_39 = arith.constant 1.280000e+02 : f32
    %115 = vector.broadcast %cst_39 : f32 to vector<8x1xf32>
    %116 = arith.divf %114, %115 : vector<8x1xf32>
    %117 = vector.broadcast %109 : vector<8x1xf32> to vector<8x128xf32>
    %118 = arith.subf %101, %117 : vector<8x128xf32>
    %cst_40 = arith.constant 9.99999974E-6 : f32
    %119 = vector.broadcast %cst_40 : f32 to vector<8x1xf32>
    %120 = arith.addf %116, %119 : vector<8x1xf32>
    %121 = math.rsqrt %120 : vector<8x1xf32>
    %122 = vector.broadcast %121 : vector<8x1xf32> to vector<8x128xf32>
    %123 = arith.mulf %118, %122 : vector<8x128xf32>
    %124 = vector.broadcast %103 : vector<1x128xf32> to vector<8x128xf32>
    %125 = arith.mulf %123, %124 : vector<8x128xf32>
    %126 = vector.broadcast %105 : vector<1x128xf32> to vector<8x128xf32>
    %127 = arith.addf %125, %126 : vector<8x128xf32>
    %128 = arith.truncf %127 : vector<8x128xf32> to vector<8x128xbf16>
    %c0_41 = arith.constant 0 : index
    %c0_42 = arith.constant 0 : index
    %c0_43 = arith.constant 0 : index
    %129 = vector.load %arg12[%c0_41, %c0_42, %c0_43] : memref<1x128x512xbf16, #tpu.memory_space<vmem>>, vector<1x128x512xbf16>
    %130 = vector.shape_cast %129 : vector<1x128x512xbf16> to vector<128x512xbf16>
    %cst_44 = arith.constant dense<0.000000e+00> : vector<8x512xf32>
    %131 = tpu.matmul %128, %130, %cst_44 {dimension_numbers = #tpu.dot_dimension_numbers<[1], [0], [0], [1], [0, 0, 1, 1], [], []>} : vector<8x128xbf16>, vector<128x512xbf16>, vector<8x512xf32> -> vector<8x512xf32>
    %c0_45 = arith.constant 0 : index
    %c0_46 = arith.constant 0 : index
    %c0_47 = arith.constant 0 : index
    %132 = vector.load %arg13[%c0_45, %c0_46, %c0_47] : memref<1x1x512xf32, #tpu.memory_space<vmem>>, vector<1x1x512xf32>
    %133 = vector.shape_cast %132 : vector<1x1x512xf32> to vector<1x512xf32>
    %134 = vector.broadcast %133 : vector<1x512xf32> to vector<8x512xf32>
    %135 = arith.addf %131, %134 : vector<8x512xf32>
    %cst_48 = arith.constant 1.702000e+00 : f32
    %136 = vector.broadcast %cst_48 : f32 to vector<8x512xf32>
    %137 = arith.mulf %136, %135 : vector<8x512xf32>
    %138 = arith.negf %137 : vector<8x512xf32>
    %139 = math.exp %138 : vector<8x512xf32>
    %cst_49 = arith.constant 1.000000e+00 : f32
    %140 = vector.broadcast %cst_49 : f32 to vector<8x512xf32>
    %141 = arith.addf %140, %139 : vector<8x512xf32>
    %142 = arith.divf %140, %141 : vector<8x512xf32>
    %143 = arith.mulf %135, %142 : vector<8x512xf32>
    %144 = arith.truncf %143 : vector<8x512xf32> to vector<8x512xbf16>
    %c0_50 = arith.constant 0 : index
    %c0_51 = arith.constant 0 : index
    %c0_52 = arith.constant 0 : index
    %145 = vector.load %arg14[%c0_50, %c0_51, %c0_52] : memref<1x512x128xbf16, #tpu.memory_space<vmem>>, vector<1x512x128xbf16>
    %146 = vector.shape_cast %145 : vector<1x512x128xbf16> to vector<512x128xbf16>
    %cst_53 = arith.constant dense<0.000000e+00> : vector<8x128xf32>
    %147 = tpu.matmul %144, %146, %cst_53 {dimension_numbers = #tpu.dot_dimension_numbers<[1], [0], [0], [1], [0, 0, 1, 1], [], []>} : vector<8x512xbf16>, vector<512x128xbf16>, vector<8x128xf32> -> vector<8x128xf32>
    %c0_54 = arith.constant 0 : index
    %c0_55 = arith.constant 0 : index
    %c0_56 = arith.constant 0 : index
    %148 = vector.load %arg15[%c0_54, %c0_55, %c0_56] : memref<1x1x128xf32, #tpu.memory_space<vmem>>, vector<1x1x128xf32>
    %149 = vector.shape_cast %148 : vector<1x1x128xf32> to vector<1x128xf32>
    %150 = vector.broadcast %149 : vector<1x128xf32> to vector<8x128xf32>
    %151 = arith.addf %147, %150 : vector<8x128xf32>
    %152 = arith.addf %101, %151 : vector<8x128xf32>
    %c0_57 = arith.constant 0 : index
    %c0_58 = arith.constant 0 : index
    %153 = vector.load %arg19[%c0_57, %c0_58] : memref<8x128xf32, #tpu.memory_space<vmem>>, vector<8x128xf32>
    tpu.vector_store %arg19[%c0_57, %c0_58], %152 {strides = array<i32>} : memref<8x128xf32, #tpu.memory_space<vmem>>, vector<8x128xf32>,
    %c1_i32 = arith.constant 1 : i32
    %154 = arith.cmpi eq, %arg1, %c1_i32 : i32
    %155 = arith.extui %154 : i1 to i32
    %c0_i32_59 = arith.constant 0 : i32
    %156 = arith.cmpi ne, %155, %c0_i32_59 : i32
    scf.if %156 {
      %c0_60 = arith.constant 0 : index
      %c0_61 = arith.constant 0 : index
      %157 = vector.load %arg16[%c0_60, %c0_61] : memref<1x128xf32, #tpu.memory_space<vmem>>, vector<1x128xf32>
      %c0_62 = arith.constant 0 : index
      %c0_63 = arith.constant 0 : index
      %158 = vector.load %arg17[%c0_62, %c0_63] : memref<1x128xf32, #tpu.memory_space<vmem>>, vector<1x128xf32>
      %cst_64 = arith.constant dense<0.000000e+00> : vector<8xf32>
      %159 = vector.multi_reduction <add>, %152, %cst_64 [1] : vector<8x128xf32> to vector<8xf32>
      %160 = vector.shape_cast %159 : vector<8xf32> to vector<8x1xf32>
      %cst_65 = arith.constant 1.280000e+02 : f32
      %161 = vector.broadcast %cst_65 : f32 to vector<8x1xf32>
      %162 = arith.divf %160, %161 : vector<8x1xf32>
      %163 = vector.broadcast %162 : vector<8x1xf32> to vector<8x128xf32>
      %164 = arith.subf %152, %163 : vector<8x128xf32>
      %165 = arith.mulf %164, %164 : vector<8x128xf32>
      %cst_66 = arith.constant dense<0.000000e+00> : vector<8xf32>
      %166 = vector.multi_reduction <add>, %165, %cst_66 [1] : vector<8x128xf32> to vector<8xf32>
      %167 = vector.shape_cast %166 : vector<8xf32> to vector<8x1xf32>
      %cst_67 = arith.constant 1.280000e+02 : f32
      %168 = vector.broadcast %cst_67 : f32 to vector<8x1xf32>
      %169 = arith.divf %167, %168 : vector<8x1xf32>
      %170 = vector.broadcast %162 : vector<8x1xf32> to vector<8x128xf32>
      %171 = arith.subf %152, %170 : vector<8x128xf32>
      %cst_68 = arith.constant 9.99999974E-6 : f32
      %172 = vector.broadcast %cst_68 : f32 to vector<8x1xf32>
      %173 = arith.addf %169, %172 : vector<8x1xf32>
      %174 = math.rsqrt %173 : vector<8x1xf32>
      %175 = vector.broadcast %174 : vector<8x1xf32> to vector<8x128xf32>
      %176 = arith.mulf %171, %175 : vector<8x128xf32>
      %177 = vector.broadcast %157 : vector<1x128xf32> to vector<8x128xf32>
      %178 = arith.mulf %176, %177 : vector<8x128xf32>
      %179 = vector.broadcast %158 : vector<1x128xf32> to vector<8x128xf32>
      %180 = arith.addf %178, %179 : vector<8x128xf32>
      %c0_69 = arith.constant 0 : index
      %c0_70 = arith.constant 0 : index
      %c0_71 = arith.constant 0 : index
      %181 = vector.load %arg18[%c0_69, %c0_70, %c0_71] : memref<1x8x128xf32, #tpu.memory_space<vmem>>, vector<1x8x128xf32>
      %182 = vector.shape_cast %181 : vector<1x8x128xf32> to vector<8x128xf32>
      %183 = vector.shape_cast %180 : vector<8x128xf32> to vector<1x8x128xf32>
      tpu.vector_store %arg18[%c0_69, %c0_70, %c0_71], %183 {strides = array<i32>} : memref<1x8x128xf32, #tpu.memory_space<vmem>>, vector<1x8x128xf32>,
    } else {
    }
    return
  }
  func.func @transform_0(%arg0: i32, %arg1: i32) -> (i32, i32, i32) {
    %c0_i32 = arith.constant 0 : i32
    %c0_i32_0 = arith.constant 0 : i32
    %c0_i32_1 = arith.constant 0 : i32
    return %arg0, %c0_i32, %c0_i32_0 : i32, i32, i32
  }
  func.func @transform_1(%arg0: i32, %arg1: i32) -> (i32, i32) {
    %c0_i32 = arith.constant 0 : i32
    %c0_i32_0 = arith.constant 0 : i32
    %c0_i32_1 = arith.constant 0 : i32
    return %c0_i32, %c0_i32_0 : i32, i32
  }
  func.func @transform_2(%arg0: i32, %arg1: i32) -> (i32, i32, i32) {
    %c0_i32 = arith.constant 0 : i32
    %c0_i32_0 = arith.constant 0 : i32
    %c0_i32_1 = arith.constant 0 : i32
    return %arg1, %c0_i32, %c0_i32_0 : i32, i32, i32
  }
  func.func @transform_3(%arg0: i32, %arg1: i32) -> (i32, i32, i32) {
    %c0_i32 = arith.constant 0 : i32
    %c0_i32_0 = arith.constant 0 : i32
    %c0_i32_1 = arith.constant 0 : i32
    return %arg1, %c0_i32, %c0_i32_0 : i32, i32, i32
  }
  func.func @transform_4(%arg0: i32, %arg1: i32) -> (i32, i32, i32) {
    %c0_i32 = arith.constant 0 : i32
    %c0_i32_0 = arith.constant 0 : i32
    %c0_i32_1 = arith.constant 0 : i32
    return %arg1, %c0_i32, %c0_i32_0 : i32, i32, i32
  }
  func.func @transform_5(%arg0: i32, %arg1: i32) -> (i32, i32, i32) {
    %c0_i32 = arith.constant 0 : i32
    %c0_i32_0 = arith.constant 0 : i32
    %c0_i32_1 = arith.constant 0 : i32
    return %arg1, %c0_i32, %c0_i32_0 : i32, i32, i32
  }
  func.func @transform_6(%arg0: i32, %arg1: i32) -> (i32, i32, i32) {
    %c0_i32 = arith.constant 0 : i32
    %c0_i32_0 = arith.constant 0 : i32
    %c0_i32_1 = arith.constant 0 : i32
    return %arg1, %c0_i32, %c0_i32_0 : i32, i32, i32
  }
  func.func @transform_7(%arg0: i32, %arg1: i32) -> (i32, i32, i32) {
    %c0_i32 = arith.constant 0 : i32
    %c0_i32_0 = arith.constant 0 : i32
    %c0_i32_1 = arith.constant 0 : i32
    return %arg1, %c0_i32, %c0_i32_0 : i32, i32, i32
  }
  func.func @transform_8(%arg0: i32, %arg1: i32) -> (i32, i32, i32) {
    %c0_i32 = arith.constant 0 : i32
    %c0_i32_0 = arith.constant 0 : i32
    %c0_i32_1 = arith.constant 0 : i32
    return %arg1, %c0_i32, %c0_i32_0 : i32, i32, i32
  }
  func.func @transform_9(%arg0: i32, %arg1: i32) -> (i32, i32, i32) {
    %c0_i32 = arith.constant 0 : i32
    %c0_i32_0 = arith.constant 0 : i32
    %c0_i32_1 = arith.constant 0 : i32
    return %arg1, %c0_i32, %c0_i32_0 : i32, i32, i32
  }
  func.func @transform_10(%arg0: i32, %arg1: i32) -> (i32, i32, i32) {
    %c0_i32 = arith.constant 0 : i32
    %c0_i32_0 = arith.constant 0 : i32
    %c0_i32_1 = arith.constant 0 : i32
    return %arg1, %c0_i32, %c0_i32_0 : i32, i32, i32
  }
  func.func @transform_11(%arg0: i32, %arg1: i32) -> (i32, i32, i32) {
    %c0_i32 = arith.constant 0 : i32
    %c0_i32_0 = arith.constant 0 : i32
    %c0_i32_1 = arith.constant 0 : i32
    return %arg1, %c0_i32, %c0_i32_0 : i32, i32, i32
  }
  func.func @transform_12(%arg0: i32, %arg1: i32) -> (i32, i32, i32) {
    %c0_i32 = arith.constant 0 : i32
    %c0_i32_0 = arith.constant 0 : i32
    %c0_i32_1 = arith.constant 0 : i32
    return %arg1, %c0_i32, %c0_i32_0 : i32, i32, i32
  }
  func.func @transform_13(%arg0: i32, %arg1: i32) -> (i32, i32, i32) {
    %c0_i32 = arith.constant 0 : i32
    %c0_i32_0 = arith.constant 0 : i32
    %c0_i32_1 = arith.constant 0 : i32
    return %arg1, %c0_i32, %c0_i32_0 : i32, i32, i32
  }
  func.func @transform_14(%arg0: i32, %arg1: i32) -> (i32, i32) {
    %c0_i32 = arith.constant 0 : i32
    %c0_i32_0 = arith.constant 0 : i32
    %c0_i32_1 = arith.constant 0 : i32
    return %c0_i32, %c0_i32_0 : i32, i32
  }
  func.func @transform_15(%arg0: i32, %arg1: i32) -> (i32, i32) {
    %c0_i32 = arith.constant 0 : i32
    %c0_i32_0 = arith.constant 0 : i32
    %c0_i32_1 = arith.constant 0 : i32
    return %c0_i32, %c0_i32_0 : i32, i32
  }
  func.func @transform_16(%arg0: i32, %arg1: i32) -> (i32, i32, i32) {
    %c0_i32 = arith.constant 0 : i32
    %c0_i32_0 = arith.constant 0 : i32
    %c0_i32_1 = arith.constant 0 : i32
    return %arg0, %c0_i32, %c0_i32_0 : i32, i32, i32
  }
}

</mosaic_0001>

<llo_original>
// kernel: clip_forward.1
$region0: #{clip_forward.1}
  #allocation0 [shape = 'u32[]', space=smem, size = 0x4, offset = 0x4, fixed_abs, tag = 'smem constant byte address 0x4 - core index']
  #allocation1 [shape = 'u32[72,128]{1,0:T(1,128)}', space=vmem, size = 0x9000, scoped, tag = 'internal scratch']
  #allocation2 [shape = 'f32[8,128]{1,0:T(8,128)}', space=vmem, size = 0x1000, scoped, tag = 'scratch operand']
  %s0 = inlined_call_operand.vmem [shape: f32[2,8,128], index: 0, kind: input, shape index: {}]
  %s1 = inlined_call_operand.vmem [shape: f32[8,128], index: 1, kind: input, shape index: {}]
  %s2 = inlined_call_operand.vmem [shape: f32[2,1,128], index: 2, kind: input, shape index: {}]
  %s3 = inlined_call_operand.vmem [shape: f32[2,1,128], index: 3, kind: input, shape index: {}]
  %s4 = inlined_call_operand.vmem [shape: bf16[2,128,384], index: 4, kind: input, shape index: {}]
  %s5 = inlined_call_operand.vmem [shape: f32[2,1,384], index: 5, kind: input, shape index: {}]
  %s6 = inlined_call_operand.vmem [shape: bf16[2,128,128], index: 6, kind: input, shape index: {}]
  %s7 = inlined_call_operand.vmem [shape: f32[2,1,128], index: 7, kind: input, shape index: {}]
  %s8 = inlined_call_operand.vmem [shape: f32[2,1,128], index: 8, kind: input, shape index: {}]
  %s9 = inlined_call_operand.vmem [shape: f32[2,1,128], index: 9, kind: input, shape index: {}]
  %s10 = inlined_call_operand.vmem [shape: bf16[2,128,512], index: 10, kind: input, shape index: {}]
  %s11 = inlined_call_operand.vmem [shape: f32[2,1,512], index: 11, kind: input, shape index: {}]
  %s12 = inlined_call_operand.vmem [shape: bf16[2,512,128], index: 12, kind: input, shape index: {}]
  %s13 = inlined_call_operand.vmem [shape: f32[2,1,128], index: 13, kind: input, shape index: {}]
  %s14 = inlined_call_operand.vmem [shape: f32[1,128], index: 14, kind: input, shape index: {}]
  %s15 = inlined_call_operand.vmem [shape: f32[1,128], index: 15, kind: input, shape index: {}]
  %s16 = inlined_call_operand.hbm [shape: f32[2,8,128], index: 16, kind: output, shape index: {}]
  %s17 = sld [smem:[#allocation0]]
  $region105: #{clip_forward.1} parent=0
    _
  %s19 = ssub.s32 1, %s17
  %s20 = scalar_select 0, %s19, %s17
  $region1: #{clip_forward.1} parent=0
    #allocation3 [shape = 'u8[8192]{0}', space=vmem, size = 0x2000, scoped, tag = 'output window, operand 0']
    #allocation4 [shape = 's32[2]{0}', space=sflag, size = 0x8, scoped, tag = 'scoped memory for clip_forward.1']
    %21 = vsyncpa [#allocation4], 0
    %s22 = scalar_lea.sflag [#allocation4], 1
    %23 = vsyncpa %s22, 0
    loop: start=0, step=1, limit=6
    $region2: #{clip_forward.1} parent=1 // loop_pre_header
      _
    $region3: #{clip_forward.1} parent=1 // loop_header
      %s25 = sphi 0, %s29
      %p26 = scmp.ge.s32.totalorder %s25, 6
      %s32 = sphi 0, %s44
      %s33 = sphi 0, %s40
      %s34 = sphi 0, %s32
      %s35 = sphi 0, %s33
      %s36 = sphi 0, %s34
      %s37 = sphi 0, %s35
      %s47 = sphi 0, %s49
      %s50 = sphi 0, %s47
      %s51 = sphi 0, %s50
      %s67 = sphi 0, %s51
      %s71 = sphi 0, %s71
      %s73 = sphi 0, %s71
      %s74 = sphi 0, %s73
      %s88 = sphi 0, %s74
      %s94 = sphi 0, %s96
      %s97 = sphi 0, %s94
      %s98 = sphi 0, %s97
      %s114 = sphi 0, %s98
      %s120 = sphi 0, %s122
      %s123 = sphi 0, %s120
      %s124 = sphi 0, %s123
      %s140 = sphi 0, %s124
      %s146 = sphi 0, %s148
      %s149 = sphi 0, %s146
      %s150 = sphi 0, %s149
      %s166 = sphi 0, %s150
      %s172 = sphi 0, %s174
      %s175 = sphi 0, %s172
      %s176 = sphi 0, %s175
      %s192 = sphi 0, %s176
      %s198 = sphi 0, %s200
      %s201 = sphi 0, %s198
      %s202 = sphi 0, %s201
      %s218 = sphi 0, %s202
      %s224 = sphi 0, %s226
      %s227 = sphi 0, %s224
      %s228 = sphi 0, %s227
      %s244 = sphi 0, %s228
      %s250 = sphi 0, %s252
      %s253 = sphi 0, %s250
      %s254 = sphi 0, %s253
      %s270 = sphi 0, %s254
      %s276 = sphi 0, %s278
      %s279 = sphi 0, %s276
      %s280 = sphi 0, %s279
      %s296 = sphi 0, %s280
      %s302 = sphi 0, %s304
      %s305 = sphi 0, %s302
      %s306 = sphi 0, %s305
      %s322 = sphi 0, %s306
      %s328 = sphi 0, %s330
      %s331 = sphi 0, %s328
      %s332 = sphi 0, %s331
      %s348 = sphi 0, %s332
      %s354 = sphi 0, %s356
      %s357 = sphi 0, %s354
      %s358 = sphi 0, %s357
      %s374 = sphi 0, %s358
      %s380 = sphi 0, %s382
      %s383 = sphi 0, %s380
      %s384 = sphi 0, %s383
      %s400 = sphi 0, %s384
      %s404 = sphi 0, %s404
      %s406 = sphi 0, %s404
      %s407 = sphi 0, %s406
      %s421 = sphi 0, %s407
      %s425 = sphi 0, %s425
      %s427 = sphi 0, %s425
      %s428 = sphi 0, %s427
      %s442 = sphi 0, %s428
      %s448 = sphi 0, %s450
      %s451 = sphi 0, %s448
      %s452 = sphi 0, %s451
      %s468 = sphi 0, %s452
    $region4: #{clip_forward.1} parent=1 // loop_header_branch
      %28 = sbr.rel (%p26) target = $region8
    $region5: #{clip_forward.1} parent=1 // loop_body
      %s30 = ssub.s32 %s25, 1
      %s31 = ssub.s32 %s25, 2
      %s38 = sadd.s32 1, %s33
      %p39 = scmp.ge.s32.totalorder %s38, 2
      %s40 = scalar_select %p39, 0, %s38
      %s41 = sadd.s32 1, %s32
      %s42 = scalar_select %p39, %s41, %s32
      %p43 = scmp.ge.s32.totalorder %s42, 2
      %s44 = scalar_select %p43, 0, %s42
      %s45 = ssub.s32 %s32, %s44
      %p46 = scmp.eq.s32.totalorder %s45, 0
      %s48 = sadd.s32 %s47, 1
      %s49 = scalar_select %p46, %s47, %s48
      %p52 = pneg %p46
      %p53 = scmp.eq.s32.totalorder %s25, 3
      %p54 = por %p52, %p53
      %p55 = scmp.ne.s32.totalorder %s47, %s50
      %p56 = scmp.eq.s32.totalorder %s25, 0
      %p57 = por %p55, %p56
      %p58 = scmp.ne.s32.totalorder %s47, %s50
      %p59 = scmp.eq.s32.totalorder %s30, 3
      %p60 = por %p58, %p59
      %p61 = scmp.ne.s32.totalorder %s50, %s51
      %p62 = scmp.eq.s32.totalorder %s30, 0
      %p63 = por %p61, %p62
      %p64 = scmp.ne.s32.totalorder %s50, %s51
      %p65 = scmp.eq.s32.totalorder %s31, 3
      %p66 = por %p64, %p65
      %p68 = scmp.ne.s32.totalorder %s51, %s67
      %p69 = scmp.eq.s32.totalorder %s31, 0
      %p70 = por %p68, %p69
      %s72 = sadd.s32 %s71, 1
      %p75 = scmp.eq.s32.totalorder %s25, 3
      %p76 = scmp.ne.s32.totalorder %s71, %s73
      %p77 = scmp.eq.s32.totalorder %s25, 0
      %p78 = por %p76, %p77
      %p79 = scmp.ne.s32.totalorder %s71, %s73
      %p80 = scmp.eq.s32.totalorder %s30, 3
      %p81 = por %p79, %p80
      %p82 = scmp.ne.s32.totalorder %s73, %s74
      %p83 = scmp.eq.s32.totalorder %s30, 0
      %p84 = por %p82, %p83
      %p85 = scmp.ne.s32.totalorder %s73, %s74
      %p86 = scmp.eq.s32.totalorder %s31, 3
      %p87 = por %p85, %p86
      %p89 = scmp.ne.s32.totalorder %s74, %s88
      %p90 = scmp.eq.s32.totalorder %s31, 0
      %p91 = por %p89, %p90
      %s92 = ssub.s32 %s33, %s40
      %p93 = scmp.eq.s32.totalorder %s92, 0
      %s95 = sadd.s32 %s94, 1
      %s96 = scalar_select %p93, %s94, %s95
      %p99 = pneg %p93
      %p100 = scmp.eq.s32.totalorder %s25, 3
      %p101 = por %p99, %p100
      %p102 = scmp.ne.s32.totalorder %s94, %s97
      %p103 = scmp.eq.s32.totalorder %s25, 0
      %p104 = por %p102, %p103
      %p105 = scmp.ne.s32.totalorder %s94, %s97
      %p106 = scmp.eq.s32.totalorder %s30, 3
      %p107 = por %p105, %p106
      %p108 = scmp.ne.s32.totalorder %s97, %s98
      %p109 = scmp.eq.s32.totalorder %s30, 0
      %p110 = por %p108, %p109
      %p111 = scmp.ne.s32.totalorder %s97, %s98
      %p112 = scmp.eq.s32.totalorder %s31, 3
      %p113 = por %p111, %p112
      %p115 = scmp.ne.s32.totalorder %s98, %s114
      %p116 = scmp.eq.s32.totalorder %s31, 0
      %p117 = por %p115, %p116
      %s118 = ssub.s32 %s33, %s40
      %p119 = scmp.eq.s32.totalorder %s118, 0
      %s121 = sadd.s32 %s120, 1
      %s122 = scalar_select %p119, %s120, %s121
      %p125 = pneg %p119
      %p126 = scmp.eq.s32.totalorder %s25, 3
      %p127 = por %p125, %p126
      %p128 = scmp.ne.s32.totalorder %s120, %s123
      %p129 = scmp.eq.s32.totalorder %s25, 0
      %p130 = por %p128, %p129
      %p131 = scmp.ne.s32.totalorder %s120, %s123
      %p132 = scmp.eq.s32.totalorder %s30, 3
      %p133 = por %p131, %p132
      %p134 = scmp.ne.s32.totalorder %s123, %s124
      %p135 = scmp.eq.s32.totalorder %s30, 0
      %p136 = por %p134, %p135
      %p137 = scmp.ne.s32.totalorder %s123, %s124
      %p138 = scmp.eq.s32.totalorder %s31, 3
      %p139 = por %p137, %p138
      %p141 = scmp.ne.s32.totalorder %s124, %s140
      %p142 = scmp.eq.s32.totalorder %s31, 0
      %p143 = por %p141, %p142
      %s144 = ssub.s32 %s33, %s40
      %p145 = scmp.eq.s32.totalorder %s144, 0
      %s147 = sadd.s32 %s146, 1
      %s148 = scalar_select %p145, %s146, %s147
      %p151 = pneg %p145
      %p152 = scmp.eq.s32.totalorder %s25, 3
      %p153 = por %p151, %p152
      %p154 = scmp.ne.s32.totalorder %s146, %s149
      %p155 = scmp.eq.s32.totalorder %s25, 0
      %p156 = por %p154, %p155
      %p157 = scmp.ne.s32.totalorder %s146, %s149
      %p158 = scmp.eq.s32.totalorder %s30, 3
      %p159 = por %p157, %p158
      %p160 = scmp.ne.s32.totalorder %s149, %s150
      %p161 = scmp.eq.s32.totalorder %s30, 0
      %p162 = por %p160, %p161
      %p163 = scmp.ne.s32.totalorder %s149, %s150
      %p164 = scmp.eq.s32.totalorder %s31, 3
      %p165 = por %p163, %p164
      %p167 = scmp.ne.s32.totalorder %s150, %s166
      %p168 = scmp.eq.s32.totalorder %s31, 0
      %p169 = por %p167, %p168
      %s170 = ssub.s32 %s33, %s40
      %p171 = scmp.eq.s32.totalorder %s170, 0
      %s173 = sadd.s32 %s172, 1
      %s174 = scalar_select %p171, %s172, %s173
      %p177 = pneg %p171
      %p178 = scmp.eq.s32.totalorder %s25, 3
      %p179 = por %p177, %p178
      %p180 = scmp.ne.s32.totalorder %s172, %s175
      %p181 = scmp.eq.s32.totalorder %s25, 0
      %p182 = por %p180, %p181
      %p183 = scmp.ne.s32.totalorder %s172, %s175
      %p184 = scmp.eq.s32.totalorder %s30, 3
      %p185 = por %p183, %p184
      %p186 = scmp.ne.s32.totalorder %s175, %s176
      %p187 = scmp.eq.s32.totalorder %s30, 0
      %p188 = por %p186, %p187
      %p189 = scmp.ne.s32.totalorder %s175, %s176
      %p190 = scmp.eq.s32.totalorder %s31, 3
      %p191 = por %p189, %p190
      %p193 = scmp.ne.s32.totalorder %s176, %s192
      %p194 = scmp.eq.s32.totalorder %s31, 0
      %p195 = por %p193, %p194
      %s196 = ssub.s32 %s33, %s40
      %p197 = scmp.eq.s32.totalorder %s196, 0
      %s199 = sadd.s32 %s198, 1
      %s200 = scalar_select %p197, %s198, %s199
      %p203 = pneg %p197
      %p204 = scmp.eq.s32.totalorder %s25, 3
      %p205 = por %p203, %p204
      %p206 = scmp.ne.s32.totalorder %s198, %s201
      %p207 = scmp.eq.s32.totalorder %s25, 0
      %p208 = por %p206, %p207
      %p209 = scmp.ne.s32.totalorder %s198, %s201
      %p210 = scmp.eq.s32.totalorder %s30, 3
      %p211 = por %p209, %p210
      %p212 = scmp.ne.s32.totalorder %s201, %s202
      %p213 = scmp.eq.s32.totalorder %s30, 0
      %p214 = por %p212, %p213
      %p215 = scmp.ne.s32.totalorder %s201, %s202
      %p216 = scmp.eq.s32.totalorder %s31, 3
      %p217 = por %p215, %p216
      %p219 = scmp.ne.s32.totalorder %s202, %s218
      %p220 = scmp.eq.s32.totalorder %s31, 0
      %p221 = por %p219, %p220
      %s222 = ssub.s32 %s33, %s40
      %p223 = scmp.eq.s32.totalorder %s222, 0
      %s225 = sadd.s32 %s224, 1
      %s226 = scalar_select %p223, %s224, %s225
      %p229 = pneg %p223
      %p230 = scmp.eq.s32.totalorder %s25, 3
      %p231 = por %p229, %p230
      %p232 = scmp.ne.s32.totalorder %s224, %s227
      %p233 = scmp.eq.s32.totalorder %s25, 0
      %p234 = por %p232, %p233
      %p235 = scmp.ne.s32.totalorder %s224, %s227
      %p236 = scmp.eq.s32.totalorder %s30, 3
      %p237 = por %p235, %p236
      %p238 = scmp.ne.s32.totalorder %s227, %s228
      %p239 = scmp.eq.s32.totalorder %s30, 0
      %p240 = por %p238, %p239
      %p241 = scmp.ne.s32.totalorder %s227, %s228
      %p242 = scmp.eq.s32.totalorder %s31, 3
      %p243 = por %p241, %p242
      %p245 = scmp.ne.s32.totalorder %s228, %s244
      %p246 = scmp.eq.s32.totalorder %s31, 0
      %p247 = por %p245, %p246
      %s248 = ssub.s32 %s33, %s40
      %p249 = scmp.eq.s32.totalorder %s248, 0
      %s251 = sadd.s32 %s250, 1
      %s252 = scalar_select %p249, %s250, %s251
      %p255 = pneg %p249
      %p256 = scmp.eq.s32.totalorder %s25, 3
      %p257 = por %p255, %p256
      %p258 = scmp.ne.s32.totalorder %s250, %s253
      %p259 = scmp.eq.s32.totalorder %s25, 0
      %p260 = por %p258, %p259
      %p261 = scmp.ne.s32.totalorder %s250, %s253
      %p262 = scmp.eq.s32.totalorder %s30, 3
      %p263 = por %p261, %p262
      %p264 = scmp.ne.s32.totalorder %s253, %s254
      %p265 = scmp.eq.s32.totalorder %s30, 0
      %p266 = por %p264, %p265
      %p267 = scmp.ne.s32.totalorder %s253, %s254
      %p268 = scmp.eq.s32.totalorder %s31, 3
      %p269 = por %p267, %p268
      %p271 = scmp.ne.s32.totalorder %s254, %s270
      %p272 = scmp.eq.s32.totalorder %s31, 0
      %p273 = por %p271, %p272
      %s274 = ssub.s32 %s33, %s40
      %p275 = scmp.eq.s32.totalorder %s274, 0
      %s277 = sadd.s32 %s276, 1
      %s278 = scalar_select %p275, %s276, %s277
      %p281 = pneg %p275
      %p282 = scmp.eq.s32.totalorder %s25, 3
      %p283 = por %p281, %p282
      %p284 = scmp.ne.s32.totalorder %s276, %s279
      %p285 = scmp.eq.s32.totalorder %s25, 0
      %p286 = por %p284, %p285
      %p287 = scmp.ne.s32.totalorder %s276, %s279
      %p288 = scmp.eq.s32.totalorder %s30, 3
      %p289 = por %p287, %p288
      %p290 = scmp.ne.s32.totalorder %s279, %s280
      %p291 = scmp.eq.s32.totalorder %s30, 0
      %p292 = por %p290, %p291
      %p293 = scmp.ne.s32.totalorder %s279, %s280
      %p294 = scmp.eq.s32.totalorder %s31, 3
      %p295 = por %p293, %p294
      %p297 = scmp.ne.s32.totalorder %s280, %s296
      %p298 = scmp.eq.s32.totalorder %s31, 0
      %p299 = por %p297, %p298
      %s300 = ssub.s32 %s33, %s40
      %p301 = scmp.eq.s32.totalorder %s300, 0
      %s303 = sadd.s32 %s302, 1
      %s304 = scalar_select %p301, %s302, %s303
      %p307 = pneg %p301
      %p308 = scmp.eq.s32.totalorder %s25, 3
      %p309 = por %p307, %p308
      %p310 = scmp.ne.s32.totalorder %s302, %s305
      %p311 = scmp.eq.s32.totalorder %s25, 0
      %p312 = por %p310, %p311
      %p313 = scmp.ne.s32.totalorder %s302, %s305
      %p314 = scmp.eq.s32.totalorder %s30, 3
      %p315 = por %p313, %p314
      %p316 = scmp.ne.s32.totalorder %s305, %s306
      %p317 = scmp.eq.s32.totalorder %s30, 0
      %p318 = por %p316, %p317
      %p319 = scmp.ne.s32.totalorder %s305, %s306
      %p320 = scmp.eq.s32.totalorder %s31, 3
      %p321 = por %p319, %p320
      %p323 = scmp.ne.s32.totalorder %s306, %s322
      %p324 = scmp.eq.s32.totalorder %s31, 0
      %p325 = por %p323, %p324
      %s326 = ssub.s32 %s33, %s40
      %p327 = scmp.eq.s32.totalorder %s326, 0
      %s329 = sadd.s32 %s328, 1
      %s330 = scalar_select %p327, %s328, %s329
      %p333 = pneg %p327
      %p334 = scmp.eq.s32.totalorder %s25, 3
      %p335 = por %p333, %p334
      %p336 = scmp.ne.s32.totalorder %s328, %s331
      %p337 = scmp.eq.s32.totalorder %s25, 0
      %p338 = por %p336, %p337
      %p339 = scmp.ne.s32.totalorder %s328, %s331
      %p340 = scmp.eq.s32.totalorder %s30, 3
      %p341 = por %p339, %p340
      %p342 = scmp.ne.s32.totalorder %s331, %s332
      %p343 = scmp.eq.s32.totalorder %s30, 0
      %p344 = por %p342, %p343
      %p345 = scmp.ne.s32.totalorder %s331, %s332
      %p346 = scmp.eq.s32.totalorder %s31, 3
      %p347 = por %p345, %p346
      %p349 = scmp.ne.s32.totalorder %s332, %s348
      %p350 = scmp.eq.s32.totalorder %s31, 0
      %p351 = por %p349, %p350
      %s352 = ssub.s32 %s33, %s40
      %p353 = scmp.eq.s32.totalorder %s352, 0
      %s355 = sadd.s32 %s354, 1
      %s356 = scalar_select %p353, %s354, %s355
      %p359 = pneg %p353
      %p360 = scmp.eq.s32.totalorder %s25, 3
      %p361 = por %p359, %p360
      %p362 = scmp.ne.s32.totalorder %s354, %s357
      %p363 = scmp.eq.s32.totalorder %s25, 0
      %p364 = por %p362, %p363
      %p365 = scmp.ne.s32.totalorder %s354, %s357
      %p366 = scmp.eq.s32.totalorder %s30, 3
      %p367 = por %p365, %p366
      %p368 = scmp.ne.s32.totalorder %s357, %s358
      %p369 = scmp.eq.s32.totalorder %s30, 0
      %p370 = por %p368, %p369
      %p371 = scmp.ne.s32.totalorder %s357, %s358
      %p372 = scmp.eq.s32.totalorder %s31, 3
      %p373 = por %p371, %p372
      %p375 = scmp.ne.s32.totalorder %s358, %s374
      %p376 = scmp.eq.s32.totalorder %s31, 0
      %p377 = por %p375, %p376
      %s378 = ssub.s32 %s33, %s40
      %p379 = scmp.eq.s32.totalorder %s378, 0
      %s381 = sadd.s32 %s380, 1
      %s382 = scalar_select %p379, %s380, %s381
      %p385 = pneg %p379
      %p386 = scmp.eq.s32.totalorder %s25, 3
      %p387 = por %p385, %p386
      %p388 = scmp.ne.s32.totalorder %s380, %s383
      %p389 = scmp.eq.s32.totalorder %s25, 0
      %p390 = por %p388, %p389
      %p391 = scmp.ne.s32.totalorder %s380, %s383
      %p392 = scmp.eq.s32.totalorder %s30, 3
      %p393 = por %p391, %p392
      %p394 = scmp.ne.s32.totalorder %s383, %s384
      %p395 = scmp.eq.s32.totalorder %s30, 0
      %p396 = por %p394, %p395
      %p397 = scmp.ne.s32.totalorder %s383, %s384
      %p398 = scmp.eq.s32.totalorder %s31, 3
      %p399 = por %p397, %p398
      %p401 = scmp.ne.s32.totalorder %s384, %s400
      %p402 = scmp.eq.s32.totalorder %s31, 0
      %p403 = por %p401, %p402
      %s405 = sadd.s32 %s404, 1
      %p408 = scmp.eq.s32.totalorder %s25, 3
      %p409 = scmp.ne.s32.totalorder %s404, %s406
      %p410 = scmp.eq.s32.totalorder %s25, 0
      %p411 = por %p409, %p410
      %p412 = scmp.ne.s32.totalorder %s404, %s406
      %p413 = scmp.eq.s32.totalorder %s30, 3
      %p414 = por %p412, %p413
      %p415 = scmp.ne.s32.totalorder %s406, %s407
      %p416 = scmp.eq.s32.totalorder %s30, 0
      %p417 = por %p415, %p416
      %p418 = scmp.ne.s32.totalorder %s406, %s407
      %p419 = scmp.eq.s32.totalorder %s31, 3
      %p420 = por %p418, %p419
      %p422 = scmp.ne.s32.totalorder %s407, %s421
      %p423 = scmp.eq.s32.totalorder %s31, 0
      %p424 = por %p422, %p423
      %s426 = sadd.s32 %s425, 1
      %p429 = scmp.eq.s32.totalorder %s25, 3
      %p430 = scmp.ne.s32.totalorder %s425, %s427
      %p431 = scmp.eq.s32.totalorder %s25, 0
      %p432 = por %p430, %p431
      %p433 = scmp.ne.s32.totalorder %s425, %s427
      %p434 = scmp.eq.s32.totalorder %s30, 3
      %p435 = por %p433, %p434
      %p436 = scmp.ne.s32.totalorder %s427, %s428
      %p437 = scmp.eq.s32.totalorder %s30, 0
      %p438 = por %p436, %p437
      %p439 = scmp.ne.s32.totalorder %s427, %s428
      %p440 = scmp.eq.s32.totalorder %s31, 3
      %p441 = por %p439, %p440
      %p443 = scmp.ne.s32.totalorder %s428, %s442
      %p444 = scmp.eq.s32.totalorder %s31, 0
      %p445 = por %p443, %p444
      %s446 = ssub.s32 %s32, %s44
      %p447 = scmp.eq.s32.totalorder %s446, 0
      %s449 = sadd.s32 %s448, 1
      %s450 = scalar_select %p447, %s448, %s449
      %p453 = pneg %p447
      %p454 = scmp.eq.s32.totalorder %s25, 3
      %p455 = por %p453, %p454
      %p456 = scmp.ne.s32.totalorder %s448, %s451
      %p457 = scmp.eq.s32.totalorder %s25, 0
      %p458 = por %p456, %p457
      %p459 = scmp.ne.s32.totalorder %s448, %s451
      %p460 = scmp.eq.s32.totalorder %s30, 3
      %p461 = por %p459, %p460
      %p462 = scmp.ne.s32.totalorder %s451, %s452
      %p463 = scmp.eq.s32.totalorder %s30, 0
      %p464 = por %p462, %p463
      %p465 = scmp.ne.s32.totalorder %s451, %s452
      %p466 = scmp.eq.s32.totalorder %s31, 3
      %p467 = por %p465, %p466
      %p469 = scmp.ne.s32.totalorder %s452, %s468
      %p470 = scmp.eq.s32.totalorder %s31, 0
      %p471 = por %p469, %p470
      %p472 = scmp.le.s32.totalorder 1, %s25
      %p473 = scmp.lt.s32.totalorder %s25, 5
      %p474 = pnand %p472, %p473
      %p475 = pneg %p474
      // Predicated region
      $region9: #{clip_forward.1} parent=5 // pred_check
        _
      $region10: #{clip_forward.1} parent=5 // pred_check_branch
        %477 = sbr.rel (%p474) target = $region12
      $region11: #{clip_forward.1} parent=5 // pred_region
        %s478 = ssub.s32 %s25, 1
        // Predicated region
        $region13: #{clip_forward.1} parent=11 // pred_check
          %p479 = pneg %p84
        $region14: #{clip_forward.1} parent=11 // pred_check_branch
          %481 = sbr.rel (%p479) target = $region16
        $region15: #{clip_forward.1} parent=11 // pred_region
          _
        $region16: #{clip_forward.1} parent=11 // pred_fallthru
          _
        // Predicated region
        $region17: #{clip_forward.1} parent=11 // pred_check
          %p482 = pneg %p417
        $region18: #{clip_forward.1} parent=11 // pred_check_branch
          %484 = sbr.rel (%p482) target = $region20
        $region19: #{clip_forward.1} parent=11 // pred_region
          _
        $region20: #{clip_forward.1} parent=11 // pred_fallthru
          _
        // Predicated region
        $region21: #{clip_forward.1} parent=11 // pred_check
          %p485 = pneg %p438
        $region22: #{clip_forward.1} parent=11 // pred_check_branch
          %487 = sbr.rel (%p485) target = $region24
        $region23: #{clip_forward.1} parent=11 // pred_region
          _
        $region24: #{clip_forward.1} parent=11 // pred_fallthru
          _
      $region12: #{clip_forward.1} parent=5 // pred_fallthru
        _
      %p488 = scmp.lt.s32.totalorder %s25, 4
      // Predicated region
      $region25: #{clip_forward.1} parent=5 // pred_check
        %p489 = pneg %p488
      $region26: #{clip_forward.1} parent=5 // pred_check_branch
        %491 = sbr.rel (%p489) target = $region28
      $region27: #{clip_forward.1} parent=5 // pred_region
        // Predicated region
        $region29: #{clip_forward.1} parent=27 // pred_check
          %p492 = pneg %p57
        $region30: #{clip_forward.1} parent=27 // pred_check_branch
          %494 = sbr.rel (%p492) target = $region32
        $region31: #{clip_forward.1} parent=27 // pred_region
          %p495 = scmp.lt.s32.totalorder %s32, 1
          %s496 = scalar_select %p495, %s32, 1
          %s497 = smul.addr %s496, 8
          %s498 = scalar_lea.vmem %s0, %s497
        $region32: #{clip_forward.1} parent=27 // pred_fallthru
          _
        // Predicated region
        $region33: #{clip_forward.1} parent=27 // pred_check
          %p499 = pneg %p104
        $region34: #{clip_forward.1} parent=27 // pred_check_branch
          %501 = sbr.rel (%p499) target = $region36
        $region35: #{clip_forward.1} parent=27 // pred_region
          %p502 = scmp.lt.s32.totalorder %s33, 1
          %s503 = scalar_select %p502, %s33, 1
          %s504 = scalar_lea.vmem %s2, %s503
        $region36: #{clip_forward.1} parent=27 // pred_fallthru
          _
        // Predicated region
        $region37: #{clip_forward.1} parent=27 // pred_check
          %p505 = pneg %p130
        $region38: #{clip_forward.1} parent=27 // pred_check_branch
          %507 = sbr.rel (%p505) target = $region40
        $region39: #{clip_forward.1} parent=27 // pred_region
          %p508 = scmp.lt.s32.totalorder %s33, 1
          %s509 = scalar_select %p508, %s33, 1
          %s510 = scalar_lea.vmem %s3, %s509
        $region40: #{clip_forward.1} parent=27 // pred_fallthru
          _
        // Predicated region
        $region41: #{clip_forward.1} parent=27 // pred_check
          %p511 = pneg %p156
        $region42: #{clip_forward.1} parent=27 // pred_check_branch
          %513 = sbr.rel (%p511) target = $region44
        $region43: #{clip_forward.1} parent=27 // pred_region
          %p514 = scmp.lt.s32.totalorder %s33, 1
          %s515 = scalar_select %p514, %s33, 1
          %s516 = smul.addr %s515, 48
          %s517 = smul.addr %s516, 4
          %s518 = scalar_lea.vmem %s4, %s517
        $region44: #{clip_forward.1} parent=27 // pred_fallthru
          _
        // Predicated region
        $region45: #{clip_forward.1} parent=27 // pred_check
          %p519 = pneg %p182
        $region46: #{clip_forward.1} parent=27 // pred_check_branch
          %521 = sbr.rel (%p519) target = $region48
        $region47: #{clip_forward.1} parent=27 // pred_region
          %p522 = scmp.lt.s32.totalorder %s33, 1
          %s523 = scalar_select %p522, %s33, 1
          %s524 = smul.addr %s523, 3
          %s525 = scalar_lea.vmem %s5, %s524
        $region48: #{clip_forward.1} parent=27 // pred_fallthru
          _
        // Predicated region
        $region49: #{clip_forward.1} parent=27 // pred_check
          %p526 = pneg %p208
        $region50: #{clip_forward.1} parent=27 // pred_check_branch
          %528 = sbr.rel (%p526) target = $region52
        $region51: #{clip_forward.1} parent=27 // pred_region
          %p529 = scmp.lt.s32.totalorder %s33, 1
          %s530 = scalar_select %p529, %s33, 1
          %s531 = smul.addr %s530, 16
          %s532 = smul.addr %s531, 4
          %s533 = scalar_lea.vmem %s6, %s532
        $region52: #{clip_forward.1} parent=27 // pred_fallthru
          _
        // Predicated region
        $region53: #{clip_forward.1} parent=27 // pred_check
          %p534 = pneg %p234
        $region54: #{clip_forward.1} parent=27 // pred_check_branch
          %536 = sbr.rel (%p534) target = $region56
        $region55: #{clip_forward.1} parent=27 // pred_region
          %p537 = scmp.lt.s32.totalorder %s33, 1
          %s538 = scalar_select %p537, %s33, 1
          %s539 = scalar_lea.vmem %s7, %s538
        $region56: #{clip_forward.1} parent=27 // pred_fallthru
          _
        // Predicated region
        $region57: #{clip_forward.1} parent=27 // pred_check
          %p540 = pneg %p260
        $region58: #{clip_forward.1} parent=27 // pred_check_branch
          %542 = sbr.rel (%p540) target = $region60
        $region59: #{clip_forward.1} parent=27 // pred_region
          %p543 = scmp.lt.s32.totalorder %s33, 1
          %s544 = scalar_select %p543, %s33, 1
          %s545 = scalar_lea.vmem %s8, %s544
        $region60: #{clip_forward.1} parent=27 // pred_fallthru
          _
        // Predicated region
        $region61: #{clip_forward.1} parent=27 // pred_check
          %p546 = pneg %p286
        $region62: #{clip_forward.1} parent=27 // pred_check_branch
          %548 = sbr.rel (%p546) target = $region64
        $region63: #{clip_forward.1} parent=27 // pred_region
          %p549 = scmp.lt.s32.totalorder %s33, 1
          %s550 = scalar_select %p549, %s33, 1
          %s551 = scalar_lea.vmem %s9, %s550
        $region64: #{clip_forward.1} parent=27 // pred_fallthru
          _
        // Predicated region
        $region65: #{clip_forward.1} parent=27 // pred_check
          %p552 = pneg %p312
        $region66: #{clip_forward.1} parent=27 // pred_check_branch
          %554 = sbr.rel (%p552) target = $region68
        $region67: #{clip_forward.1} parent=27 // pred_region
          %p555 = scmp.lt.s32.totalorder %s33, 1
          %s556 = scalar_select %p555, %s33, 1
          %s557 = smul.addr %s556, 64
          %s558 = smul.addr %s557, 4
          %s559 = scalar_lea.vmem %s10, %s558
        $region68: #{clip_forward.1} parent=27 // pred_fallthru
          _
        // Predicated region
        $region69: #{clip_forward.1} parent=27 // pred_check
          %p560 = pneg %p338
        $region70: #{clip_forward.1} parent=27 // pred_check_branch
          %562 = sbr.rel (%p560) target = $region72
        $region71: #{clip_forward.1} parent=27 // pred_region
          %p563 = scmp.lt.s32.totalorder %s33, 1
          %s564 = scalar_select %p563, %s33, 1
          %s565 = smul.addr %s564, 4
          %s566 = scalar_lea.vmem %s11, %s565
        $region72: #{clip_forward.1} parent=27 // pred_fallthru
          _
        // Predicated region
        $region73: #{clip_forward.1} parent=27 // pred_check
          %p567 = pneg %p364
        $region74: #{clip_forward.1} parent=27 // pred_check_branch
          %569 = sbr.rel (%p567) target = $region76
        $region75: #{clip_forward.1} parent=27 // pred_region
          %p570 = scmp.lt.s32.totalorder %s33, 1
          %s571 = scalar_select %p570, %s33, 1
          %s572 = smul.addr %s571, 64
          %s573 = smul.addr %s572, 4
          %s574 = scalar_lea.vmem %s12, %s573
        $region76: #{clip_forward.1} parent=27 // pred_fallthru
          _
        // Predicated region
        $region77: #{clip_forward.1} parent=27 // pred_check
          %p575 = pneg %p390
        $region78: #{clip_forward.1} parent=27 // pred_check_branch
          %577 = sbr.rel (%p575) target = $region80
        $region79: #{clip_forward.1} parent=27 // pred_region
          %p578 = scmp.lt.s32.totalorder %s33, 1
          %s579 = scalar_select %p578, %s33, 1
          %s580 = scalar_lea.vmem %s13, %s579
        $region80: #{clip_forward.1} parent=27 // pred_fallthru
          _
      $region28: #{clip_forward.1} parent=5 // pred_fallthru
        _
      %p581 = scmp.le.s32.totalorder 1, %s25
      %p582 = scmp.lt.s32.totalorder %s25, 5
      %p583 = pnand %p581, %p582
      %p584 = pneg %p583
      // Predicated region
      $region81: #{clip_forward.1} parent=5 // pred_check
        _
      $region82: #{clip_forward.1} parent=5 // pred_check_branch
        %586 = sbr.rel (%p583) target = $region84
      $region83: #{clip_forward.1} parent=5 // pred_region
        %s587 = ssub.s32 %s25, 1
        %p588 = scmp.lt.s32.totalorder %s34, 1
        %s589 = scalar_select %p588, %s34, 1
        %s590 = smul.addr %s589, 8
        %s591 = scalar_lea.vmem %s0, %s590
        %p592 = pneg %p63
        %p593 = pneg %p60
        %p594 = pneg %p84
        %p595 = pneg %p81
        %p596 = scmp.lt.s32.totalorder %s35, 1
        %s597 = scalar_select %p596, %s35, 1
        %s598 = scalar_lea.vmem %s2, %s597
        %p599 = pneg %p110
        %p600 = pneg %p107
        %p601 = scmp.lt.s32.totalorder %s35, 1
        %s602 = scalar_select %p601, %s35, 1
        %s603 = scalar_lea.vmem %s3, %s602
        %p604 = pneg %p136
        %p605 = pneg %p133
        %p606 = scmp.lt.s32.totalorder %s35, 1
        %s607 = scalar_select %p606, %s35, 1
        %s608 = smul.addr %s607, 48
        %s609 = smul.addr %s608, 4
        %s610 = scalar_lea.vmem %s4, %s609
        %p611 = pneg %p162
        %p612 = pneg %p159
        %p613 = scmp.lt.s32.totalorder %s35, 1
        %s614 = scalar_select %p613, %s35, 1
        %s615 = smul.addr %s614, 3
        %s616 = scalar_lea.vmem %s5, %s615
        %p617 = pneg %p188
        %p618 = pneg %p185
        %p619 = scmp.lt.s32.totalorder %s35, 1
        %s620 = scalar_select %p619, %s35, 1
        %s621 = smul.addr %s620, 16
        %s622 = smul.addr %s621, 4
        %s623 = scalar_lea.vmem %s6, %s622
        %p624 = pneg %p214
        %p625 = pneg %p211
        %p626 = scmp.lt.s32.totalorder %s35, 1
        %s627 = scalar_select %p626, %s35, 1
        %s628 = scalar_lea.vmem %s7, %s627
        %p629 = pneg %p240
        %p630 = pneg %p237
        %p631 = scmp.lt.s32.totalorder %s35, 1
        %s632 = scalar_select %p631, %s35, 1
        %s633 = scalar_lea.vmem %s8, %s632
        %p634 = pneg %p266
        %p635 = pneg %p263
        %p636 = scmp.lt.s32.totalorder %s35, 1
        %s637 = scalar_select %p636, %s35, 1
        %s638 = scalar_lea.vmem %s9, %s637
        %p639 = pneg %p292
        %p640 = pneg %p289
        %p641 = scmp.lt.s32.totalorder %s35, 1
        %s642 = scalar_select %p641, %s35, 1
        %s643 = smul.addr %s642, 64
        %s644 = smul.addr %s643, 4
        %s645 = scalar_lea.vmem %s10, %s644
        %p646 = pneg %p318
        %p647 = pneg %p315
        %p648 = scmp.lt.s32.totalorder %s35, 1
        %s649 = scalar_select %p648, %s35, 1
        %s650 = smul.addr %s649, 4
        %s651 = scalar_lea.vmem %s11, %s650
        %p652 = pneg %p344
        %p653 = pneg %p341
        %p654 = scmp.lt.s32.totalorder %s35, 1
        %s655 = scalar_select %p654, %s35, 1
        %s656 = smul.addr %s655, 64
        %s657 = smul.addr %s656, 4
        %s658 = scalar_lea.vmem %s12, %s657
        %p659 = pneg %p370
        %p660 = pneg %p367
        %p661 = scmp.lt.s32.totalorder %s35, 1
        %s662 = scalar_select %p661, %s35, 1
        %s663 = scalar_lea.vmem %s13, %s662
        %p664 = pneg %p396
        %p665 = pneg %p393
        %p666 = pneg %p417
        %p667 = pneg %p414
        %p668 = pneg %p438
        %p669 = pneg %p435
        %p670 = pneg %p464
        %p671 = pneg %p461
        %s672 = sand.u32 %s451, 1
        %s673 = scalar_lea.sflag [#allocation4], %s672
        %s674 = sand.u32 %s451, 1
        %s675 = smul.addr %s674, 8
        %s676 = scalar_lea.vmem [#allocation3], %s675
        %p677 = scmp.lt.s32.totalorder %s34, 1
        %s678 = scalar_select %p677, %s34, 1
        %s679 = smul.addr %s678, 8
        %s680 = scalar_lea.vmem %s0, %s679
        %p681 = scmp.lt.s32.totalorder %s35, 1
        %s682 = scalar_select %p681, %s35, 1
        %s683 = scalar_lea.vmem %s2, %s682
        %p684 = scmp.lt.s32.totalorder %s35, 1
        %s685 = scalar_select %p684, %s35, 1
        %s686 = scalar_lea.vmem %s3, %s685
        %p687 = scmp.lt.s32.totalorder %s35, 1
        %s688 = scalar_select %p687, %s35, 1
        %s689 = smul.addr %s688, 48
        %s690 = smul.addr %s689, 4
        %s691 = scalar_lea.vmem %s4, %s690
        %p692 = scmp.lt.s32.totalorder %s35, 1
        %s693 = scalar_select %p692, %s35, 1
        %s694 = smul.addr %s693, 3
        %s695 = scalar_lea.vmem %s5, %s694
        %p696 = scmp.lt.s32.totalorder %s35, 1
        %s697 = scalar_select %p696, %s35, 1
        %s698 = smul.addr %s697, 16
        %s699 = smul.addr %s698, 4
        %s700 = scalar_lea.vmem %s6, %s699
        %p701 = scmp.lt.s32.totalorder %s35, 1
        %s702 = scalar_select %p701, %s35, 1
        %s703 = scalar_lea.vmem %s7, %s702
        %p704 = scmp.lt.s32.totalorder %s35, 1
        %s705 = scalar_select %p704, %s35, 1
        %s706 = scalar_lea.vmem %s8, %s705
        %p707 = scmp.lt.s32.totalorder %s35, 1
        %s708 = scalar_select %p707, %s35, 1
        %s709 = scalar_lea.vmem %s9, %s708
        %p710 = scmp.lt.s32.totalorder %s35, 1
        %s711 = scalar_select %p710, %s35, 1
        %s712 = smul.addr %s711, 64
        %s713 = smul.addr %s712, 4
        %s714 = scalar_lea.vmem %s10, %s713
        %p715 = scmp.lt.s32.totalorder %s35, 1
        %s716 = scalar_select %p715, %s35, 1
        %s717 = smul.addr %s716, 4
        %s718 = scalar_lea.vmem %s11, %s717
        %p719 = scmp.lt.s32.totalorder %s35, 1
        %s720 = scalar_select %p719, %s35, 1
        %s721 = smul.addr %s720, 64
        %s722 = smul.addr %s721, 4
        %s723 = scalar_lea.vmem %s12, %s722
        %p724 = scmp.lt.s32.totalorder %s35, 1
        %s725 = scalar_select %p724, %s35, 1
        %s726 = scalar_lea.vmem %s13, %s725
        %p728 = scmp.eq.s32.totalorder %s35, 0
        // Predicated region
        $region85: #{clip_forward.1} parent=83 // pred_check
          %p729 = pneg %p728
        $region86: #{clip_forward.1} parent=83 // pred_check_branch
          %731 = sbr.rel (%p729) target = $region88
        $region87: #{clip_forward.1} parent=83 // pred_region
          %v732 = vld [vmem:[%s680] sm:$0xff]
          %v733 = vld [vmem:[%s1] sm:$0xff]
          %v734 = vadd.f32 %v732, %v733
          %735 = vst [vmem:[#allocation2] sm:$0xff] %v734
        $region88: #{clip_forward.1} parent=83 // pred_fallthru
          _
        %v736 = vld [vmem:[#allocation2] sm:$0xff]
        %v737 = vld [vmem:[%s683] sm:$0x1]
        %v738 = vld [vmem:[%s686] sm:$0x1]
        %739 = vadd.xlane.f32.xlu0 %v736
        %v740 = vpop.xlane.xlu0 %739
        %v741 = vrcp.pop 128.0
        %v742 = vmul.f32 128.0, %v741
        %v743 = vsub.f32 1.0, %v742
        %v744 = vmul.f32 %v741, %v743
        %v745 = vadd.f32 %v741, %v744
        %vm746 = vweird.f32 %v741
        %v747 = vsel %vm746, %v741, %v745
        %v748 = vmul.f32 %v740, %v747
        %v749 = vsub.f32 %v736, %v748
        %v750 = vmul.f32 %v749, %v749
        %751 = vadd.xlane.f32.xlu0 %v750
        %v752 = vpop.xlane.xlu0 %751
        %v753 = vmul.f32 %v752, %v747
        %v754 = vadd.f32 %v753, 1e-05
        %v755 = vrsqrt.pop %v754
        %v756 = vmul.f32 %v755, %v754
        %v757 = vmul.f32 %v756, %v755
        %v758 = vmul.f32 0.5, %v757
        %v759 = vsub.f32 1.5, %v758
        %v760 = vmul.f32 %v755, %v759
        %vm761 = vweird.f32 %v754
        %vm762 = vweird.f32 %v755
        %vm763 = vmor %vm761, %vm762
        %v764 = vsel %vm763, %v755, %v760
        %v765 = vmul.f32 %v749, %v764
        %v767 = vperm.slane %v737, 0
        %v769 = vmul.f32 %v765, %v767
        %v771 = vperm.slane %v738, 0
        %v773 = vadd.f32 %v769, %v771
        %v774 = vpack.c.bf16 %v773, %v773
        %v775 = vld [vmem:[%s691] sm:$0xff]
        %v776 = vld [vmem:[%s691 + $0x8] sm:$0xf]
        %v777 = vld [vmem:[%s691 + $0xc] sm:$0xff]
        %v778 = vld [vmem:[%s691 + $0x14] sm:$0xf]
        %v779 = vld [vmem:[%s691 + $0x18] sm:$0xff]
        %v780 = vld [vmem:[%s691 + $0x20] sm:$0xf]
        %v781 = vld [vmem:[%s691 + $0x24] sm:$0xff]
        %v782 = vld [vmem:[%s691 + $0x2c] sm:$0xf]
        %v783 = vld [vmem:[%s691 + $0x30] sm:$0xff]
        %v784 = vld [vmem:[%s691 + $0x38] sm:$0xf]
        %v785 = vld [vmem:[%s691 + $0x3c] sm:$0xff]
        %v786 = vld [vmem:[%s691 + $0x44] sm:$0xf]
        %v787 = vld [vmem:[%s691 + $0x48] sm:$0xff]
        %v788 = vld [vmem:[%s691 + $0x50] sm:$0xf]
        %v789 = vld [vmem:[%s691 + $0x54] sm:$0xff]
        %v790 = vld [vmem:[%s691 + $0x5c] sm:$0xf]
        %v791 = vld [vmem:[%s691 + $0x60] sm:$0xff]
        %v792 = vld [vmem:[%s691 + $0x68] sm:$0xf]
        %v793 = vld [vmem:[%s691 + $0x6c] sm:$0xff]
        %v794 = vld [vmem:[%s691 + $0x74] sm:$0xf]
        %v795 = vld [vmem:[%s691 + $0x78] sm:$0xff]
        %v796 = vld [vmem:[%s691 + $0x80] sm:$0xf]
        %v797 = vld [vmem:[%s691 + $0x84] sm:$0xff]
        %v798 = vld [vmem:[%s691 + $0x8c] sm:$0xf]
        %v799 = vld [vmem:[%s691 + $0x90] sm:$0xff]
        %v800 = vld [vmem:[%s691 + $0x98] sm:$0xf]
        %v801 = vld [vmem:[%s691 + $0x9c] sm:$0xff]
        %v802 = vld [vmem:[%s691 + $0xa4] sm:$0xf]
        %v803 = vld [vmem:[%s691 + $0xa8] sm:$0xff]
        %v804 = vld [vmem:[%s691 + $0xb0] sm:$0xf]
        %v805 = vld [vmem:[%s691 + $0xb4] sm:$0xff]
        %v806 = vld [vmem:[%s691 + $0xbc] sm:$0xf]
        %v807 = vld [vmem:[%s695] sm:$0x7]
        %v809 = vperm.slane %v807, 0
        %v810 = vperm.slane %v807, 1
        %v811 = vperm.slane %v807, 2
        %v847 = vunpack.c.l.b16 %v775
        %v848 = vunpack.c.h.b16 %v775
        %v849 = vunpack.c.l.b16 %v776
        %v850 = vunpack.c.l.b16 %v777
        %v851 = vunpack.c.h.b16 %v777
        %v852 = vunpack.c.l.b16 %v778
        %v853 = vunpack.c.l.b16 %v779
        %v854 = vunpack.c.h.b16 %v779
        %v855 = vunpack.c.l.b16 %v780
        %v856 = vunpack.c.l.b16 %v781
        %v857 = vunpack.c.h.b16 %v781
        %v858 = vunpack.c.l.b16 %v782
        %v859 = vunpack.c.l.b16 %v783
        %v860 = vunpack.c.h.b16 %v783
        %v861 = vunpack.c.l.b16 %v784
        %v862 = vunpack.c.l.b16 %v785
        %v863 = vunpack.c.h.b16 %v785
        %v864 = vunpack.c.l.b16 %v786
        %v865 = vunpack.c.l.b16 %v787
        %v866 = vunpack.c.h.b16 %v787
        %v867 = vunpack.c.l.b16 %v788
        %v868 = vunpack.c.l.b16 %v789
        %v869 = vunpack.c.h.b16 %v789
        %v870 = vunpack.c.l.b16 %v790
        %v871 = vunpack.c.l.b16 %v791
        %v872 = vunpack.c.h.b16 %v791
        %v873 = vunpack.c.l.b16 %v792
        %v874 = vunpack.c.l.b16 %v793
        %v875 = vunpack.c.h.b16 %v793
        %v876 = vunpack.c.l.b16 %v794
        %v877 = vunpack.c.l.b16 %v795
        %v878 = vunpack.c.h.b16 %v795
        %v879 = vunpack.c.l.b16 %v796
        %v880 = vunpack.c.l.b16 %v797
        %v881 = vunpack.c.h.b16 %v797
        %v882 = vunpack.c.l.b16 %v798
        %v883 = vunpack.c.l.b16 %v799
        %v884 = vunpack.c.h.b16 %v799
        %v885 = vunpack.c.l.b16 %v800
        %v886 = vunpack.c.l.b16 %v801
        %v887 = vunpack.c.h.b16 %v801
        %v888 = vunpack.c.l.b16 %v802
        %v889 = vunpack.c.l.b16 %v803
        %v890 = vunpack.c.h.b16 %v803
        %v891 = vunpack.c.l.b16 %v804
        %v892 = vunpack.c.l.b16 %v805
        %v893 = vunpack.c.h.b16 %v805
        %v894 = vunpack.c.l.b16 %v806
        %v895 = vpack.c.b16 %v850, %v847
        %v896 = vpack.c.b16 %v851, %v848
        %v897 = vpack.c.b16 %v852, %v849
        %v898 = vpack.c.b16 %v856, %v853
        %v899 = vpack.c.b16 %v857, %v854
        %v900 = vpack.c.b16 %v858, %v855
        %v901 = vpack.c.b16 %v862, %v859
        %v902 = vpack.c.b16 %v863, %v860
        %v903 = vpack.c.b16 %v864, %v861
        %v904 = vpack.c.b16 %v868, %v865
        %v905 = vpack.c.b16 %v869, %v866
        %v906 = vpack.c.b16 %v870, %v867
        %v907 = vpack.c.b16 %v874, %v871
        %v908 = vpack.c.b16 %v875, %v872
        %v909 = vpack.c.b16 %v876, %v873
        %v910 = vpack.c.b16 %v880, %v877
        %v911 = vpack.c.b16 %v881, %v878
        %v912 = vpack.c.b16 %v882, %v879
        %v913 = vpack.c.b16 %v886, %v883
        %v914 = vpack.c.b16 %v887, %v884
        %v915 = vpack.c.b16 %v888, %v885
        %v916 = vpack.c.b16 %v892, %v889
        %v917 = vpack.c.b16 %v893, %v890
        %v918 = vpack.c.b16 %v894, %v891
        %943 = vmatpush.bf16.msra.mxu0 %v916
        %944 = vmatpush.bf16.msra.mxu0 %v913
        %945 = vmatpush.bf16.msra.mxu0 %v910
        %946 = vmatpush.bf16.msra.mxu0 %v907
        %947 = vmatpush.bf16.msra.mxu0 %v904
        %948 = vmatpush.bf16.msra.mxu0 %v901
        %949 = vmatpush.bf16.msra.mxu0 %v898
        %950 = vmatpush.bf16.msra.mxu0 %v895
        %951 = vmatmul.bf16.gmra.mxu0 %v774
        %v952 = vpop.f32.mrf.mxu0
        %v953 = vadd.f32 %v809, %v952
        %v954 = vpop.f32.mrf.mxu0
        %955 = vdwg.mxu0
        %956 = vmatpush.bf16.msra.mxu0 %v917
        %957 = vmatpush.bf16.msra.mxu0 %v914
        %958 = vmatpush.bf16.msra.mxu0 %v911
        %959 = vmatpush.bf16.msra.mxu0 %v908
        %960 = vmatpush.bf16.msra.mxu0 %v905
        %961 = vmatpush.bf16.msra.mxu0 %v902
        %962 = vmatpush.bf16.msra.mxu0 %v899
        %963 = vmatpush.bf16.msra.mxu0 %v896
        %964 = vmatmul.bf16.gmra.mxu0 %v774
        %v965 = vpop.f32.mrf.mxu0
        %v966 = vadd.f32 %v810, %v965
        %v967 = vpop.f32.mrf.mxu0
        %968 = vdwg.mxu0
        %969 = vmatpush.bf16.msra.mxu0 %v918
        %970 = vmatpush.bf16.msra.mxu0 %v915
        %971 = vmatpush.bf16.msra.mxu0 %v912
        %972 = vmatpush.bf16.msra.mxu0 %v909
        %973 = vmatpush.bf16.msra.mxu0 %v906
        %974 = vmatpush.bf16.msra.mxu0 %v903
        %975 = vmatpush.bf16.msra.mxu0 %v900
        %976 = vmatpush.bf16.msra.mxu0 %v897
        %977 = vmatmul.bf16.gmra.mxu0 %v774
        %v978 = vpop.f32.mrf.mxu0
        %v979 = vadd.f32 %v811, %v978
        %v980 = vpop.f32.mrf.mxu0
        %981 = vdwg.mxu0
        %983 = vrot.lane.b32.xlu0 %v953, 96
        %v984 = vpop.permute.xlu0 %983
        %986 = vrot.lane.b32.xlu0 %v953, 64
        %v987 = vpop.permute.xlu0 %986
        %989 = vrot.lane.b32.xlu0 %v953, 32
        %v990 = vpop.permute.xlu0 %989
        %v992 = vpack.c.bf16 %v953, %v953
        %v993 = vpack.c.bf16 %v984, %v984
        %v994 = vpack.c.bf16 %v987, %v987
        %v995 = vpack.c.bf16 %v990, %v990
        %997 = vrot.lane.b32.xlu0 %v966, 96
        %v998 = vpop.permute.xlu0 %997
        %1000 = vrot.lane.b32.xlu0 %v966, 64
        %v1001 = vpop.permute.xlu0 %1000
        %1003 = vrot.lane.b32.xlu0 %v966, 32
        %v1004 = vpop.permute.xlu0 %1003
        %v1006 = vpack.c.bf16 %v966, %v966
        %v1007 = vpack.c.bf16 %v998, %v998
        %v1008 = vpack.c.bf16 %v1001, %v1001
        %v1009 = vpack.c.bf16 %v1004, %v1004
        %1011 = vrot.lane.b32.xlu0 %v979, 96
        %v1012 = vpop.permute.xlu0 %1011
        %1014 = vrot.lane.b32.xlu0 %v979, 64
        %v1015 = vpop.permute.xlu0 %1014
        %1017 = vrot.lane.b32.xlu0 %v979, 32
        %v1018 = vpop.permute.xlu0 %1017
        %v1020 = vpack.c.bf16 %v979, %v979
        %v1021 = vpack.c.bf16 %v1012, %v1012
        %v1022 = vpack.c.bf16 %v1015, %v1015
        %v1023 = vpack.c.bf16 %v1018, %v1018
        %vm1024 = vcmask 261120
        %v1026 = vsel %vm1024, %v992, 0
        %v1029 = vsel %vm1024, %v1006, 0
        %1031 = vmatpush.bf16.xpose.msra.mxu0 0
        %1032 = vmatpush.bf16.xpose.msra.mxu0 0
        %1033 = vmatpush.bf16.xpose.msra.mxu0 0
        %1034 = vmatpush.bf16.xpose.msra.mxu0 0
        %1035 = vmatpush.bf16.xpose.msra.mxu0 0
        %1036 = vmatpush.bf16.xpose.msra.mxu0 0
        %1037 = vmatpush.bf16.xpose.msra.mxu0 0
        %1038 = vmatpush.bf16.xpose.msra.mxu0 %v1029
        %1039 = vmatmul.bf16.gmra.mxu0 %v1026
        %v1040 = vpop.f32.mrf.mxu0
        %v1041 = vadd.f32 0.0, %v1040
        %v1042 = vpop.f32.mrf.mxu0
        %1043 = vdwg.mxu0
        %v1045 = vsel %vm1024, %v993, 0
        %v1048 = vsel %vm1024, %v1007, 0
        %1050 = vmatpush.bf16.xpose.msra.mxu0 0
        %1051 = vmatpush.bf16.xpose.msra.mxu0 0
        %1052 = vmatpush.bf16.xpose.msra.mxu0 0
        %1053 = vmatpush.bf16.xpose.msra.mxu0 0
        %1054 = vmatpush.bf16.xpose.msra.mxu0 0
        %1055 = vmatpush.bf16.xpose.msra.mxu0 0
        %1056 = vmatpush.bf16.xpose.msra.mxu0 0
        %1057 = vmatpush.bf16.xpose.msra.mxu0 %v1048
        %1058 = vmatmul.bf16.gmra.mxu0 %v1045
        %v1059 = vpop.f32.mrf.mxu0
        %v1060 = vadd.f32 0.0, %v1059
        %v1061 = vpop.f32.mrf.mxu0
        %1062 = vdwg.mxu0
        %v1064 = vsel %vm1024, %v994, 0
        %v1067 = vsel %vm1024, %v1008, 0
        %1069 = vmatpush.bf16.xpose.msra.mxu0 0
        %1070 = vmatpush.bf16.xpose.msra.mxu0 0
        %1071 = vmatpush.bf16.xpose.msra.mxu0 0
        %1072 = vmatpush.bf16.xpose.msra.mxu0 0
        %1073 = vmatpush.bf16.xpose.msra.mxu0 0
        %1074 = vmatpush.bf16.xpose.msra.mxu0 0
        %1075 = vmatpush.bf16.xpose.msra.mxu0 0
        %1076 = vmatpush.bf16.xpose.msra.mxu0 %v1067
        %1077 = vmatmul.bf16.gmra.mxu0 %v1064
        %v1078 = vpop.f32.mrf.mxu0
        %v1079 = vadd.f32 0.0, %v1078
        %v1080 = vpop.f32.mrf.mxu0
        %1081 = vdwg.mxu0
        %v1083 = vsel %vm1024, %v995, 0
        %v1086 = vsel %vm1024, %v1009, 0
        %1088 = vmatpush.bf16.xpose.msra.mxu0 0
        %1089 = vmatpush.bf16.xpose.msra.mxu0 0
        %1090 = vmatpush.bf16.xpose.msra.mxu0 0
        %1091 = vmatpush.bf16.xpose.msra.mxu0 0
        %1092 = vmatpush.bf16.xpose.msra.mxu0 0
        %1093 = vmatpush.bf16.xpose.msra.mxu0 0
        %1094 = vmatpush.bf16.xpose.msra.mxu0 0
        %1095 = vmatpush.bf16.xpose.msra.mxu0 %v1086
        %1096 = vmatmul.bf16.gmra.mxu0 %v1083
        %v1097 = vpop.f32.mrf.mxu0
        %v1098 = vadd.f32 0.0, %v1097
        %v1099 = vpop.f32.mrf.mxu0
        %1100 = vdwg.mxu0
        %vm1101 = vcmask 64512
        %v1102 = vsel %vm1101, %v1041, -inf
        %1103 = vmax.xlane.f32.xlu0 %v1102
        %v1104 = vpop.xlane.xlu0 %1103
        %v1105 = vsel %vm1101, %v1060, -inf
        %1106 = vmax.xlane.f32.xlu0 %v1105
        %v1107 = vpop.xlane.xlu0 %1106
        %v1108 = vsel %vm1101, %v1079, -inf
        %1109 = vmax.xlane.f32.xlu0 %v1108
        %v1110 = vpop.xlane.xlu0 %1109
        %v1111 = vsel %vm1101, %v1098, -inf
        %1112 = vmax.xlane.f32.xlu0 %v1111
        %v1113 = vpop.xlane.xlu0 %1112
        %v1114 = vsub.f32 %v1041, %v1104
        %v1115 = vsub.f32 %v1060, %v1107
        %v1116 = vsub.f32 %v1079, %v1110
        %v1117 = vsub.f32 %v1098, %v1113
        %v1118 = vmul.f32 %v1114, 1.442695
        %v1119 = vpow.pop %v1118
        %v1120 = vmul.f32 %v1115, 1.442695
        %v1121 = vpow.pop %v1120
        %v1122 = vmul.f32 %v1116, 1.442695
        %v1123 = vpow.pop %v1122
        %v1124 = vmul.f32 %v1117, 1.442695
        %v1125 = vpow.pop %v1124
        %v1126 = vsel %vm1101, %v1119, 0.0
        %1127 = vadd.xlane.f32.xlu0 %v1126
        %v1128 = vpop.xlane.xlu0 %1127
        %v1129 = vsel %vm1101, %v1121, 0.0
        %1130 = vadd.xlane.f32.xlu0 %v1129
        %v1131 = vpop.xlane.xlu0 %1130
        %v1132 = vsel %vm1101, %v1123, 0.0
        %1133 = vadd.xlane.f32.xlu0 %v1132
        %v1134 = vpop.xlane.xlu0 %1133
        %v1135 = vsel %vm1101, %v1125, 0.0
        %1136 = vadd.xlane.f32.xlu0 %v1135
        %v1137 = vpop.xlane.xlu0 %1136
        %v1138 = vrcp.pop %v1128
        %v1139 = vrcp.pop %v1131
        %v1140 = vrcp.pop %v1134
        %v1141 = vrcp.pop %v1137
        %v1142 = vmul.f32 %v1119, %v1138
        %v1143 = vmul.f32 %v1121, %v1139
        %v1144 = vmul.f32 %v1123, %v1140
        %v1145 = vmul.f32 %v1125, %v1141
        %v1146 = vpack.c.bf16 %v1142, %v1142
        %v1147 = vpack.c.bf16 %v1143, %v1143
        %v1148 = vpack.c.bf16 %v1144, %v1144
        %v1149 = vpack.c.bf16 %v1145, %v1145
        %v1151 = vsel %vm1101, %v1146, 0
        %vm1153 = vcmask 1043456
        %v1155 = vsel %vm1153, %v1020, 0
        %1157 = vmatpush.bf16.msra.mxu0 0
        %1158 = vmatpush.bf16.msra.mxu0 0
        %1159 = vmatpush.bf16.msra.mxu0 0
        %1160 = vmatpush.bf16.msra.mxu0 0
        %1161 = vmatpush.bf16.msra.mxu0 0
        %1162 = vmatpush.bf16.msra.mxu0 0
        %1163 = vmatpush.bf16.msra.mxu0 0
        %1164 = vmatpush.bf16.msra.mxu0 %v1155
        %1165 = vmatmul.bf16.gmra.mxu0 %v1151
        %v1166 = vpop.f32.mrf.mxu0
        %v1167 = vadd.f32 0.0, %v1166
        %v1168 = vpop.f32.mrf.mxu0
        %1169 = vdwg.mxu0
        %v1171 = vsel %vm1101, %v1147, 0
        %v1174 = vsel %vm1153, %v1021, 0
        %1176 = vmatpush.bf16.msra.mxu0 0
        %1177 = vmatpush.bf16.msra.mxu0 0
        %1178 = vmatpush.bf16.msra.mxu0 0
        %1179 = vmatpush.bf16.msra.mxu0 0
        %1180 = vmatpush.bf16.msra.mxu0 0
        %1181 = vmatpush.bf16.msra.mxu0 0
        %1182 = vmatpush.bf16.msra.mxu0 0
        %1183 = vmatpush.bf16.msra.mxu0 %v1174
        %1184 = vmatmul.bf16.gmra.mxu0 %v1171
        %v1185 = vpop.f32.mrf.mxu0
        %v1186 = vadd.f32 0.0, %v1185
        %v1187 = vpop.f32.mrf.mxu0
        %1188 = vdwg.mxu0
        %v1190 = vsel %vm1101, %v1148, 0
        %v1193 = vsel %vm1153, %v1022, 0
        %1195 = vmatpush.bf16.msra.mxu0 0
        %1196 = vmatpush.bf16.msra.mxu0 0
        %1197 = vmatpush.bf16.msra.mxu0 0
        %1198 = vmatpush.bf16.msra.mxu0 0
        %1199 = vmatpush.bf16.msra.mxu0 0
        %1200 = vmatpush.bf16.msra.mxu0 0
        %1201 = vmatpush.bf16.msra.mxu0 0
        %1202 = vmatpush.bf16.msra.mxu0 %v1193
        %1203 = vmatmul.bf16.gmra.mxu0 %v1190
        %v1204 = vpop.f32.mrf.mxu0
        %v1205 = vadd.f32 0.0, %v1204
        %v1206 = vpop.f32.mrf.mxu0
        %1207 = vdwg.mxu0
        %v1209 = vsel %vm1101, %v1149, 0
        %v1212 = vsel %vm1153, %v1023, 0
        %1214 = vmatpush.bf16.msra.mxu0 0
        %1215 = vmatpush.bf16.msra.mxu0 0
        %1216 = vmatpush.bf16.msra.mxu0 0
        %1217 = vmatpush.bf16.msra.mxu0 0
        %1218 = vmatpush.bf16.msra.mxu0 0
        %1219 = vmatpush.bf16.msra.mxu0 0
        %1220 = vmatpush.bf16.msra.mxu0 0
        %1221 = vmatpush.bf16.msra.mxu0 %v1212
        %1222 = vmatmul.bf16.gmra.mxu0 %v1209
        %v1223 = vpop.f32.mrf.mxu0
        %v1224 = vadd.f32 0.0, %v1223
        %v1225 = vpop.f32.mrf.mxu0
        %1226 = vdwg.mxu0
        %1228 = vrot.lane.b32.xlu0 %v1186, 32
        %v1229 = vpop.permute.xlu0 %1228
        %1232 = vrot.lane.b32.xlu0 %v1205, 64
        %v1233 = vpop.permute.xlu0 %1232
        %1236 = vrot.lane.b32.xlu0 %v1224, 96
        %v1237 = vpop.permute.xlu0 %1236
        %v1239 = vsel %vm1024, %v1167, %v1229
        %vm1240 = vcmask 523264
        %v1241 = vsel %vm1240, %v1239, %v1233
        %vm1242 = vcmask 785408
        %v1243 = vsel %vm1242, %v1241, %v1237
        %v1244 = vpack.c.bf16 %v1243, %v1243
        %v1245 = vld [vmem:[%s700] sm:$0xf]
        %v1246 = vld [vmem:[%s700 + $0x4] sm:$0xf]
        %v1247 = vld [vmem:[%s700 + $0x8] sm:$0xf]
        %v1248 = vld [vmem:[%s700 + $0xc] sm:$0xf]
        %v1249 = vld [vmem:[%s700 + $0x10] sm:$0xf]
        %v1250 = vld [vmem:[%s700 + $0x14] sm:$0xf]
        %v1251 = vld [vmem:[%s700 + $0x18] sm:$0xf]
        %v1252 = vld [vmem:[%s700 + $0x1c] sm:$0xf]
        %v1253 = vld [vmem:[%s700 + $0x20] sm:$0xf]
        %v1254 = vld [vmem:[%s700 + $0x24] sm:$0xf]
        %v1255 = vld [vmem:[%s700 + $0x28] sm:$0xf]
        %v1256 = vld [vmem:[%s700 + $0x2c] sm:$0xf]
        %v1257 = vld [vmem:[%s700 + $0x30] sm:$0xf]
        %v1258 = vld [vmem:[%s700 + $0x34] sm:$0xf]
        %v1259 = vld [vmem:[%s700 + $0x38] sm:$0xf]
        %v1260 = vld [vmem:[%s700 + $0x3c] sm:$0xf]
        %v1261 = vld [vmem:[%s703] sm:$0x1]
        %v1263 = vperm.slane %v1261, 0
        %v1281 = vunpack.c.l.b16 %v1245
        %v1282 = vunpack.c.l.b16 %v1246
        %v1283 = vunpack.c.l.b16 %v1247
        %v1284 = vunpack.c.l.b16 %v1248
        %v1285 = vunpack.c.l.b16 %v1249
        %v1286 = vunpack.c.l.b16 %v1250
        %v1287 = vunpack.c.l.b16 %v1251
        %v1288 = vunpack.c.l.b16 %v1252
        %v1289 = vunpack.c.l.b16 %v1253
        %v1290 = vunpack.c.l.b16 %v1254
        %v1291 = vunpack.c.l.b16 %v1255
        %v1292 = vunpack.c.l.b16 %v1256
        %v1293 = vunpack.c.l.b16 %v1257
        %v1294 = vunpack.c.l.b16 %v1258
        %v1295 = vunpack.c.l.b16 %v1259
        %v1296 = vunpack.c.l.b16 %v1260
        %v1297 = vpack.c.b16 %v1282, %v1281
        %v1298 = vpack.c.b16 %v1284, %v1283
        %v1299 = vpack.c.b16 %v1286, %v1285
        %v1300 = vpack.c.b16 %v1288, %v1287
        %v1301 = vpack.c.b16 %v1290, %v1289
        %v1302 = vpack.c.b16 %v1292, %v1291
        %v1303 = vpack.c.b16 %v1294, %v1293
        %v1304 = vpack.c.b16 %v1296, %v1295
        %1313 = vmatpush.bf16.msra.mxu0 %v1304
        %1314 = vmatpush.bf16.msra.mxu0 %v1303
        %1315 = vmatpush.bf16.msra.mxu0 %v1302
        %1316 = vmatpush.bf16.msra.mxu0 %v1301
        %1317 = vmatpush.bf16.msra.mxu0 %v1300
        %1318 = vmatpush.bf16.msra.mxu0 %v1299
        %1319 = vmatpush.bf16.msra.mxu0 %v1298
        %1320 = vmatpush.bf16.msra.mxu0 %v1297
        %1321 = vmatmul.bf16.gmra.mxu0 %v1244
        %v1322 = vpop.f32.mrf.mxu0
        %v1323 = vadd.f32 %v1263, %v1322
        %v1324 = vpop.f32.mrf.mxu0
        %1325 = vdwg.mxu0
        %v1326 = vadd.f32 %v736, %v1323
        %v1327 = vld [vmem:[%s706] sm:$0x1]
        %v1328 = vld [vmem:[%s709] sm:$0x1]
        %1329 = vadd.xlane.f32.xlu0 %v1326
        %v1330 = vpop.xlane.xlu0 %1329
        %v1331 = vmul.f32 %v1330, %v747
        %v1332 = vsub.f32 %v1326, %v1331
        %v1333 = vmul.f32 %v1332, %v1332
        %1334 = vadd.xlane.f32.xlu0 %v1333
        %v1335 = vpop.xlane.xlu0 %1334
        %v1336 = vmul.f32 %v1335, %v747
        %v1337 = vadd.f32 %v1336, 1e-05
        %v1338 = vrsqrt.pop %v1337
        %v1339 = vmul.f32 %v1338, %v1337
        %v1340 = vmul.f32 %v1339, %v1338
        %v1341 = vmul.f32 0.5, %v1340
        %v1342 = vsub.f32 1.5, %v1341
        %v1343 = vmul.f32 %v1338, %v1342
        %vm1344 = vweird.f32 %v1337
        %vm1345 = vweird.f32 %v1338
        %vm1346 = vmor %vm1344, %vm1345
        %v1347 = vsel %vm1346, %v1338, %v1343
        %v1348 = vmul.f32 %v1332, %v1347
        %v1350 = vperm.slane %v1327, 0
        %v1352 = vmul.f32 %v1348, %v1350
        %v1354 = vperm.slane %v1328, 0
        %v1356 = vadd.f32 %v1352, %v1354
        %v1357 = vpack.c.bf16 %v1356, %v1356
        %v1358 = vld [vmem:[%s714] sm:$0xff]
        %v1359 = vld [vmem:[%s714 + $0x8] sm:$0xff]
        %v1360 = vld [vmem:[%s714 + $0x10] sm:$0xff]
        %v1361 = vld [vmem:[%s714 + $0x18] sm:$0xff]
        %v1362 = vld [vmem:[%s714 + $0x20] sm:$0xff]
        %v1363 = vld [vmem:[%s714 + $0x28] sm:$0xff]
        %v1364 = vld [vmem:[%s714 + $0x30] sm:$0xff]
        %v1365 = vld [vmem:[%s714 + $0x38] sm:$0xff]
        %v1366 = vld [vmem:[%s714 + $0x40] sm:$0xff]
        %v1367 = vld [vmem:[%s714 + $0x48] sm:$0xff]
        %v1368 = vld [vmem:[%s714 + $0x50] sm:$0xff]
        %v1369 = vld [vmem:[%s714 + $0x58] sm:$0xff]
        %v1370 = vld [vmem:[%s714 + $0x60] sm:$0xff]
        %v1371 = vld [vmem:[%s714 + $0x68] sm:$0xff]
        %v1372 = vld [vmem:[%s714 + $0x70] sm:$0xff]
        %v1373 = vld [vmem:[%s714 + $0x78] sm:$0xff]
        %v1374 = vld [vmem:[%s714 + $0x80] sm:$0xff]
        %v1375 = vld [vmem:[%s714 + $0x88] sm:$0xff]
        %v1376 = vld [vmem:[%s714 + $0x90] sm:$0xff]
        %v1377 = vld [vmem:[%s714 + $0x98] sm:$0xff]
        %v1378 = vld [vmem:[%s714 + $0xa0] sm:$0xff]
        %v1379 = vld [vmem:[%s714 + $0xa8] sm:$0xff]
        %v1380 = vld [vmem:[%s714 + $0xb0] sm:$0xff]
        %v1381 = vld [vmem:[%s714 + $0xb8] sm:$0xff]
        %v1382 = vld [vmem:[%s714 + $0xc0] sm:$0xff]
        %v1383 = vld [vmem:[%s714 + $0xc8] sm:$0xff]
        %v1384 = vld [vmem:[%s714 + $0xd0] sm:$0xff]
        %v1385 = vld [vmem:[%s714 + $0xd8] sm:$0xff]
        %v1386 = vld [vmem:[%s714 + $0xe0] sm:$0xff]
        %v1387 = vld [vmem:[%s714 + $0xe8] sm:$0xff]
        %v1388 = vld [vmem:[%s714 + $0xf0] sm:$0xff]
        %v1389 = vld [vmem:[%s714 + $0xf8] sm:$0xff]
        %v1390 = vld [vmem:[%s718] sm:$0xf]
        %v1392 = vperm.slane %v1390, 0
        %v1393 = vperm.slane %v1390, 1
        %v1394 = vperm.slane %v1390, 2
        %v1395 = vperm.slane %v1390, 3
        %v1432 = vunpack.c.l.b16 %v1358
        %v1433 = vunpack.c.h.b16 %v1358
        %v1434 = vunpack.c.l.b16 %v1359
        %v1435 = vunpack.c.h.b16 %v1359
        %v1436 = vunpack.c.l.b16 %v1360
        %v1437 = vunpack.c.h.b16 %v1360
        %v1438 = vunpack.c.l.b16 %v1361
        %v1439 = vunpack.c.h.b16 %v1361
        %v1440 = vunpack.c.l.b16 %v1362
        %v1441 = vunpack.c.h.b16 %v1362
        %v1442 = vunpack.c.l.b16 %v1363
        %v1443 = vunpack.c.h.b16 %v1363
        %v1444 = vunpack.c.l.b16 %v1364
        %v1445 = vunpack.c.h.b16 %v1364
        %v1446 = vunpack.c.l.b16 %v1365
        %v1447 = vunpack.c.h.b16 %v1365
        %v1448 = vunpack.c.l.b16 %v1366
        %v1449 = vunpack.c.h.b16 %v1366
        %v1450 = vunpack.c.l.b16 %v1367
        %v1451 = vunpack.c.h.b16 %v1367
        %v1452 = vunpack.c.l.b16 %v1368
        %v1453 = vunpack.c.h.b16 %v1368
        %v1454 = vunpack.c.l.b16 %v1369
        %v1455 = vunpack.c.h.b16 %v1369
        %v1456 = vunpack.c.l.b16 %v1370
        %v1457 = vunpack.c.h.b16 %v1370
        %v1458 = vunpack.c.l.b16 %v1371
        %v1459 = vunpack.c.h.b16 %v1371
        %v1460 = vunpack.c.l.b16 %v1372
        %v1461 = vunpack.c.h.b16 %v1372
        %v1462 = vunpack.c.l.b16 %v1373
        %v1463 = vunpack.c.h.b16 %v1373
        %v1464 = vunpack.c.l.b16 %v1374
        %v1465 = vunpack.c.h.b16 %v1374
        %v1466 = vunpack.c.l.b16 %v1375
        %v1467 = vunpack.c.h.b16 %v1375
        %v1468 = vunpack.c.l.b16 %v1376
        %v1469 = vunpack.c.h.b16 %v1376
        %v1470 = vunpack.c.l.b16 %v1377
        %v1471 = vunpack.c.h.b16 %v1377
        %v1472 = vunpack.c.l.b16 %v1378
        %v1473 = vunpack.c.h.b16 %v1378
        %v1474 = vunpack.c.l.b16 %v1379
        %v1475 = vunpack.c.h.b16 %v1379
        %v1476 = vunpack.c.l.b16 %v1380
        %v1477 = vunpack.c.h.b16 %v1380
        %v1478 = vunpack.c.l.b16 %v1381
        %v1479 = vunpack.c.h.b16 %v1381
        %v1480 = vunpack.c.l.b16 %v1382
        %v1481 = vunpack.c.h.b16 %v1382
        %v1482 = vunpack.c.l.b16 %v1383
        %v1483 = vunpack.c.h.b16 %v1383
        %v1484 = vunpack.c.l.b16 %v1384
        %v1485 = vunpack.c.h.b16 %v1384
        %v1486 = vunpack.c.l.b16 %v1385
        %v1487 = vunpack.c.h.b16 %v1385
        %v1488 = vunpack.c.l.b16 %v1386
        %v1489 = vunpack.c.h.b16 %v1386
        %v1490 = vunpack.c.l.b16 %v1387
        %v1491 = vunpack.c.h.b16 %v1387
        %v1492 = vunpack.c.l.b16 %v1388
        %v1493 = vunpack.c.h.b16 %v1388
        %v1494 = vunpack.c.l.b16 %v1389
        %v1495 = vunpack.c.h.b16 %v1389
        %v1496 = vpack.c.b16 %v1436, %v1432
        %v1497 = vpack.c.b16 %v1437, %v1433
        %v1498 = vpack.c.b16 %v1438, %v1434
        %v1499 = vpack.c.b16 %v1439, %v1435
        %v1500 = vpack.c.b16 %v1444, %v1440
        %v1501 = vpack.c.b16 %v1445, %v1441
        %v1502 = vpack.c.b16 %v1446, %v1442
        %v1503 = vpack.c.b16 %v1447, %v1443
        %v1504 = vpack.c.b16 %v1452, %v1448
        %v1505 = vpack.c.b16 %v1453, %v1449
        %v1506 = vpack.c.b16 %v1454, %v1450
        %v1507 = vpack.c.b16 %v1455, %v1451
        %v1508 = vpack.c.b16 %v1460, %v1456
        %v1509 = vpack.c.b16 %v1461, %v1457
        %v1510 = vpack.c.b16 %v1462, %v1458
        %v1511 = vpack.c.b16 %v1463, %v1459
        %v1512 = vpack.c.b16 %v1468, %v1464
        %v1513 = vpack.c.b16 %v1469, %v1465
        %v1514 = vpack.c.b16 %v1470, %v1466
        %v1515 = vpack.c.b16 %v1471, %v1467
        %v1516 = vpack.c.b16 %v1476, %v1472
        %v1517 = vpack.c.b16 %v1477, %v1473
        %v1518 = vpack.c.b16 %v1478, %v1474
        %v1519 = vpack.c.b16 %v1479, %v1475
        %v1520 = vpack.c.b16 %v1484, %v1480
        %v1521 = vpack.c.b16 %v1485, %v1481
        %v1522 = vpack.c.b16 %v1486, %v1482
        %v1523 = vpack.c.b16 %v1487, %v1483
        %v1524 = vpack.c.b16 %v1492, %v1488
        %v1525 = vpack.c.b16 %v1493, %v1489
        %v1526 = vpack.c.b16 %v1494, %v1490
        %v1527 = vpack.c.b16 %v1495, %v1491
        %1560 = vmatpush.bf16.msra.mxu0 %v1524
        %1561 = vmatpush.bf16.msra.mxu0 %v1520
        %1562 = vmatpush.bf16.msra.mxu0 %v1516
        %1563 = vmatpush.bf16.msra.mxu0 %v1512
        %1564 = vmatpush.bf16.msra.mxu0 %v1508
        %1565 = vmatpush.bf16.msra.mxu0 %v1504
        %1566 = vmatpush.bf16.msra.mxu0 %v1500
        %1567 = vmatpush.bf16.msra.mxu0 %v1496
        %1568 = vmatmul.bf16.gmra.mxu0 %v1357
        %v1569 = vpop.f32.mrf.mxu0
        %v1570 = vadd.f32 %v1392, %v1569
        %v1571 = vpop.f32.mrf.mxu0
        %1572 = vdwg.mxu0
        %1573 = vmatpush.bf16.msra.mxu0 %v1525
        %1574 = vmatpush.bf16.msra.mxu0 %v1521
        %1575 = vmatpush.bf16.msra.mxu0 %v1517
        %1576 = vmatpush.bf16.msra.mxu0 %v1513
        %1577 = vmatpush.bf16.msra.mxu0 %v1509
        %1578 = vmatpush.bf16.msra.mxu0 %v1505
        %1579 = vmatpush.bf16.msra.mxu0 %v1501
        %1580 = vmatpush.bf16.msra.mxu0 %v1497
        %1581 = vmatmul.bf16.gmra.mxu0 %v1357
        %v1582 = vpop.f32.mrf.mxu0
        %v1583 = vadd.f32 %v1393, %v1582
        %v1584 = vpop.f32.mrf.mxu0
        %1585 = vdwg.mxu0
        %1586 = vmatpush.bf16.msra.mxu0 %v1526
        %1587 = vmatpush.bf16.msra.mxu0 %v1522
        %1588 = vmatpush.bf16.msra.mxu0 %v1518
        %1589 = vmatpush.bf16.msra.mxu0 %v1514
        %1590 = vmatpush.bf16.msra.mxu0 %v1510
        %1591 = vmatpush.bf16.msra.mxu0 %v1506
        %1592 = vmatpush.bf16.msra.mxu0 %v1502
        %1593 = vmatpush.bf16.msra.mxu0 %v1498
        %1594 = vmatmul.bf16.gmra.mxu0 %v1357
        %v1595 = vpop.f32.mrf.mxu0
        %v1596 = vadd.f32 %v1394, %v1595
        %v1597 = vpop.f32.mrf.mxu0
        %1598 = vdwg.mxu0
        %1599 = vmatpush.bf16.msra.mxu0 %v1527
        %1600 = vmatpush.bf16.msra.mxu0 %v1523
        %1601 = vmatpush.bf16.msra.mxu0 %v1519
        %1602 = vmatpush.bf16.msra.mxu0 %v1515
        %1603 = vmatpush.bf16.msra.mxu0 %v1511
        %1604 = vmatpush.bf16.msra.mxu0 %v1507
        %1605 = vmatpush.bf16.msra.mxu0 %v1503
        %1606 = vmatpush.bf16.msra.mxu0 %v1499
        %1607 = vmatmul.bf16.gmra.mxu0 %v1357
        %v1608 = vpop.f32.mrf.mxu0
        %v1609 = vadd.f32 %v1395, %v1608
        %v1610 = vpop.f32.mrf.mxu0
        %1611 = vdwg.mxu0
        %v1612 = vmul.f32 %v1570, 1.702
        %v1613 = vmul.f32 %v1583, 1.702
        %v1614 = vmul.f32 %v1596, 1.702
        %v1615 = vmul.f32 %v1609, 1.702
        %v1616 = vxor.u32 %v1612, 2147483648
        %v1617 = vxor.u32 %v1613, 2147483648
        %v1618 = vxor.u32 %v1614, 2147483648
        %v1619 = vxor.u32 %v1615, 2147483648
        %v1620 = vmul.f32 %v1616, 1.442695
        %v1621 = vpow.pop %v1620
        %v1622 = vmul.f32 %v1617, 1.442695
        %v1623 = vpow.pop %v1622
        %v1624 = vmul.f32 %v1618, 1.442695
        %v1625 = vpow.pop %v1624
        %v1626 = vmul.f32 %v1619, 1.442695
        %v1627 = vpow.pop %v1626
        %v1628 = vadd.f32 %v1621, 1.0
        %v1629 = vadd.f32 %v1623, 1.0
        %v1630 = vadd.f32 %v1625, 1.0
        %v1631 = vadd.f32 %v1627, 1.0
        %v1632 = vrcp.pop %v1628
        %v1633 = vmul.f32 %v1628, %v1632
        %v1634 = vsub.f32 1.0, %v1633
        %v1635 = vmul.f32 %v1632, %v1634
        %v1636 = vadd.f32 %v1632, %v1635
        %vm1637 = vweird.f32 %v1628
        %vm1638 = vweird.f32 %v1632
        %vm1639 = vmor %vm1637, %vm1638
        %v1640 = vsel %vm1639, %v1632, %v1636
        %v1641 = vand.u32 2147483647, %v1628
        %vm1642 = vcmp.eq.f32.partialorder %v1641, 8.507059e+37
        %v1643 = vand.u32 %v1628, 2147483648
        %v1644 = vor.u32 1.1754944e-38, %v1643
        %v1645 = vsel %vm1642, %v1644, %v1640
        %v1646 = vmul.f32 1.0, %v1645
        %v1647 = vrcp.pop %v1629
        %v1648 = vmul.f32 %v1629, %v1647
        %v1649 = vsub.f32 1.0, %v1648
        %v1650 = vmul.f32 %v1647, %v1649
        %v1651 = vadd.f32 %v1647, %v1650
        %vm1652 = vweird.f32 %v1629
        %vm1653 = vweird.f32 %v1647
        %vm1654 = vmor %vm1652, %vm1653
        %v1655 = vsel %vm1654, %v1647, %v1651
        %v1656 = vand.u32 2147483647, %v1629
        %vm1657 = vcmp.eq.f32.partialorder %v1656, 8.507059e+37
        %v1658 = vand.u32 %v1629, 2147483648
        %v1659 = vor.u32 1.1754944e-38, %v1658
        %v1660 = vsel %vm1657, %v1659, %v1655
        %v1661 = vmul.f32 1.0, %v1660
        %v1662 = vrcp.pop %v1630
        %v1663 = vmul.f32 %v1630, %v1662
        %v1664 = vsub.f32 1.0, %v1663
        %v1665 = vmul.f32 %v1662, %v1664
        %v1666 = vadd.f32 %v1662, %v1665
        %vm1667 = vweird.f32 %v1630
        %vm1668 = vweird.f32 %v1662
        %vm1669 = vmor %vm1667, %vm1668
        %v1670 = vsel %vm1669, %v1662, %v1666
        %v1671 = vand.u32 2147483647, %v1630
        %vm1672 = vcmp.eq.f32.partialorder %v1671, 8.507059e+37
        %v1673 = vand.u32 %v1630, 2147483648
        %v1674 = vor.u32 1.1754944e-38, %v1673
        %v1675 = vsel %vm1672, %v1674, %v1670
        %v1676 = vmul.f32 1.0, %v1675
        %v1677 = vrcp.pop %v1631
        %v1678 = vmul.f32 %v1631, %v1677
        %v1679 = vsub.f32 1.0, %v1678
        %v1680 = vmul.f32 %v1677, %v1679
        %v1681 = vadd.f32 %v1677, %v1680
        %vm1682 = vweird.f32 %v1631
        %vm1683 = vweird.f32 %v1677
        %vm1684 = vmor %vm1682, %vm1683
        %v1685 = vsel %vm1684, %v1677, %v1681
        %v1686 = vand.u32 2147483647, %v1631
        %vm1687 = vcmp.eq.f32.partialorder %v1686, 8.507059e+37
        %v1688 = vand.u32 %v1631, 2147483648
        %v1689 = vor.u32 1.1754944e-38, %v1688
        %v1690 = vsel %vm1687, %v1689, %v1685
        %v1691 = vmul.f32 1.0, %v1690
        %v1692 = vmul.f32 %v1570, %v1646
        %v1693 = vmul.f32 %v1583, %v1661
        %v1694 = vmul.f32 %v1596, %v1676
        %v1695 = vmul.f32 %v1609, %v1691
        %v1696 = vpack.c.bf16 %v1692, %v1692
        %v1697 = vpack.c.bf16 %v1693, %v1693
        %v1698 = vpack.c.bf16 %v1694, %v1694
        %v1699 = vpack.c.bf16 %v1695, %v1695
        %v1700 = vld [vmem:[%s723] sm:$0xf]
        %v1701 = vld [vmem:[%s723 + $0x4] sm:$0xf]
        %v1702 = vld [vmem:[%s723 + $0x8] sm:$0xf]
        %v1703 = vld [vmem:[%s723 + $0xc] sm:$0xf]
        %v1704 = vld [vmem:[%s723 + $0x10] sm:$0xf]
        %v1705 = vld [vmem:[%s723 + $0x14] sm:$0xf]
        %v1706 = vld [vmem:[%s723 + $0x18] sm:$0xf]
        %v1707 = vld [vmem:[%s723 + $0x1c] sm:$0xf]
        %v1708 = vld [vmem:[%s723 + $0x20] sm:$0xf]
        %v1709 = vld [vmem:[%s723 + $0x24] sm:$0xf]
        %v1710 = vld [vmem:[%s723 + $0x28] sm:$0xf]
        %v1711 = vld [vmem:[%s723 + $0x2c] sm:$0xf]
        %v1712 = vld [vmem:[%s723 + $0x30] sm:$0xf]
        %v1713 = vld [vmem:[%s723 + $0x34] sm:$0xf]
        %v1714 = vld [vmem:[%s723 + $0x38] sm:$0xf]
        %v1715 = vld [vmem:[%s723 + $0x3c] sm:$0xf]
        %v1716 = vld [vmem:[%s723 + $0x40] sm:$0xf]
        %v1717 = vld [vmem:[%s723 + $0x44] sm:$0xf]
        %v1718 = vld [vmem:[%s723 + $0x48] sm:$0xf]
        %v1719 = vld [vmem:[%s723 + $0x4c] sm:$0xf]
        %v1720 = vld [vmem:[%s723 + $0x50] sm:$0xf]
        %v1721 = vld [vmem:[%s723 + $0x54] sm:$0xf]
        %v1722 = vld [vmem:[%s723 + $0x58] sm:$0xf]
        %v1723 = vld [vmem:[%s723 + $0x5c] sm:$0xf]
        %v1724 = vld [vmem:[%s723 + $0x60] sm:$0xf]
        %v1725 = vld [vmem:[%s723 + $0x64] sm:$0xf]
        %v1726 = vld [vmem:[%s723 + $0x68] sm:$0xf]
        %v1727 = vld [vmem:[%s723 + $0x6c] sm:$0xf]
        %v1728 = vld [vmem:[%s723 + $0x70] sm:$0xf]
        %v1729 = vld [vmem:[%s723 + $0x74] sm:$0xf]
        %v1730 = vld [vmem:[%s723 + $0x78] sm:$0xf]
        %v1731 = vld [vmem:[%s723 + $0x7c] sm:$0xf]
        %v1732 = vld [vmem:[%s723 + $0x80] sm:$0xf]
        %v1733 = vld [vmem:[%s723 + $0x84] sm:$0xf]
        %v1734 = vld [vmem:[%s723 + $0x88] sm:$0xf]
        %v1735 = vld [vmem:[%s723 + $0x8c] sm:$0xf]
        %v1736 = vld [vmem:[%s723 + $0x90] sm:$0xf]
        %v1737 = vld [vmem:[%s723 + $0x94] sm:$0xf]
        %v1738 = vld [vmem:[%s723 + $0x98] sm:$0xf]
        %v1739 = vld [vmem:[%s723 + $0x9c] sm:$0xf]
        %v1740 = vld [vmem:[%s723 + $0xa0] sm:$0xf]
        %v1741 = vld [vmem:[%s723 + $0xa4] sm:$0xf]
        %v1742 = vld [vmem:[%s723 + $0xa8] sm:$0xf]
        %v1743 = vld [vmem:[%s723 + $0xac] sm:$0xf]
        %v1744 = vld [vmem:[%s723 + $0xb0] sm:$0xf]
        %v1745 = vld [vmem:[%s723 + $0xb4] sm:$0xf]
        %v1746 = vld [vmem:[%s723 + $0xb8] sm:$0xf]
        %v1747 = vld [vmem:[%s723 + $0xbc] sm:$0xf]
        %v1748 = vld [vmem:[%s723 + $0xc0] sm:$0xf]
        %v1749 = vld [vmem:[%s723 + $0xc4] sm:$0xf]
        %v1750 = vld [vmem:[%s723 + $0xc8] sm:$0xf]
        %v1751 = vld [vmem:[%s723 + $0xcc] sm:$0xf]
        %v1752 = vld [vmem:[%s723 + $0xd0] sm:$0xf]
        %v1753 = vld [vmem:[%s723 + $0xd4] sm:$0xf]
        %v1754 = vld [vmem:[%s723 + $0xd8] sm:$0xf]
        %v1755 = vld [vmem:[%s723 + $0xdc] sm:$0xf]
        %v1756 = vld [vmem:[%s723 + $0xe0] sm:$0xf]
        %v1757 = vld [vmem:[%s723 + $0xe4] sm:$0xf]
        %v1758 = vld [vmem:[%s723 + $0xe8] sm:$0xf]
        %v1759 = vld [vmem:[%s723 + $0xec] sm:$0xf]
        %v1760 = vld [vmem:[%s723 + $0xf0] sm:$0xf]
        %v1761 = vld [vmem:[%s723 + $0xf4] sm:$0xf]
        %v1762 = vld [vmem:[%s723 + $0xf8] sm:$0xf]
        %v1763 = vld [vmem:[%s723 + $0xfc] sm:$0xf]
        %v1764 = vld [vmem:[%s726] sm:$0x1]
        %v1766 = vperm.slane %v1764, 0
        %v1832 = vunpack.c.l.b16 %v1700
        %v1833 = vunpack.c.l.b16 %v1701
        %v1834 = vunpack.c.l.b16 %v1702
        %v1835 = vunpack.c.l.b16 %v1703
        %v1836 = vunpack.c.l.b16 %v1704
        %v1837 = vunpack.c.l.b16 %v1705
        %v1838 = vunpack.c.l.b16 %v1706
        %v1839 = vunpack.c.l.b16 %v1707
        %v1840 = vunpack.c.l.b16 %v1708
        %v1841 = vunpack.c.l.b16 %v1709
        %v1842 = vunpack.c.l.b16 %v1710
        %v1843 = vunpack.c.l.b16 %v1711
        %v1844 = vunpack.c.l.b16 %v1712
        %v1845 = vunpack.c.l.b16 %v1713
        %v1846 = vunpack.c.l.b16 %v1714
        %v1847 = vunpack.c.l.b16 %v1715
        %v1848 = vunpack.c.l.b16 %v1716
        %v1849 = vunpack.c.l.b16 %v1717
        %v1850 = vunpack.c.l.b16 %v1718
        %v1851 = vunpack.c.l.b16 %v1719
        %v1852 = vunpack.c.l.b16 %v1720
        %v1853 = vunpack.c.l.b16 %v1721
        %v1854 = vunpack.c.l.b16 %v1722
        %v1855 = vunpack.c.l.b16 %v1723
        %v1856 = vunpack.c.l.b16 %v1724
        %v1857 = vunpack.c.l.b16 %v1725
        %v1858 = vunpack.c.l.b16 %v1726
        %v1859 = vunpack.c.l.b16 %v1727
        %v1860 = vunpack.c.l.b16 %v1728
        %v1861 = vunpack.c.l.b16 %v1729
        %v1862 = vunpack.c.l.b16 %v1730
        %v1863 = vunpack.c.l.b16 %v1731
        %v1864 = vunpack.c.l.b16 %v1732
        %v1865 = vunpack.c.l.b16 %v1733
        %v1866 = vunpack.c.l.b16 %v1734
        %v1867 = vunpack.c.l.b16 %v1735
        %v1868 = vunpack.c.l.b16 %v1736
        %v1869 = vunpack.c.l.b16 %v1737
        %v1870 = vunpack.c.l.b16 %v1738
        %v1871 = vunpack.c.l.b16 %v1739
        %v1872 = vunpack.c.l.b16 %v1740
        %v1873 = vunpack.c.l.b16 %v1741
        %v1874 = vunpack.c.l.b16 %v1742
        %v1875 = vunpack.c.l.b16 %v1743
        %v1876 = vunpack.c.l.b16 %v1744
        %v1877 = vunpack.c.l.b16 %v1745
        %v1878 = vunpack.c.l.b16 %v1746
        %v1879 = vunpack.c.l.b16 %v1747
        %v1880 = vunpack.c.l.b16 %v1748
        %v1881 = vunpack.c.l.b16 %v1749
        %v1882 = vunpack.c.l.b16 %v1750
        %v1883 = vunpack.c.l.b16 %v1751
        %v1884 = vunpack.c.l.b16 %v1752
        %v1885 = vunpack.c.l.b16 %v1753
        %v1886 = vunpack.c.l.b16 %v1754
        %v1887 = vunpack.c.l.b16 %v1755
        %v1888 = vunpack.c.l.b16 %v1756
        %v1889 = vunpack.c.l.b16 %v1757
        %v1890 = vunpack.c.l.b16 %v1758
        %v1891 = vunpack.c.l.b16 %v1759
        %v1892 = vunpack.c.l.b16 %v1760
        %v1893 = vunpack.c.l.b16 %v1761
        %v1894 = vunpack.c.l.b16 %v1762
        %v1895 = vunpack.c.l.b16 %v1763
        %v1896 = vpack.c.b16 %v1833, %v1832
        %v1897 = vpack.c.b16 %v1835, %v1834
        %v1898 = vpack.c.b16 %v1837, %v1836
        %v1899 = vpack.c.b16 %v1839, %v1838
        %v1900 = vpack.c.b16 %v1841, %v1840
        %v1901 = vpack.c.b16 %v1843, %v1842
        %v1902 = vpack.c.b16 %v1845, %v1844
        %v1903 = vpack.c.b16 %v1847, %v1846
        %v1904 = vpack.c.b16 %v1849, %v1848
        %v1905 = vpack.c.b16 %v1851, %v1850
        %v1906 = vpack.c.b16 %v1853, %v1852
        %v1907 = vpack.c.b16 %v1855, %v1854
        %v1908 = vpack.c.b16 %v1857, %v1856
        %v1909 = vpack.c.b16 %v1859, %v1858
        %v1910 = vpack.c.b16 %v1861, %v1860
        %v1911 = vpack.c.b16 %v1863, %v1862
        %v1912 = vpack.c.b16 %v1865, %v1864
        %v1913 = vpack.c.b16 %v1867, %v1866
        %v1914 = vpack.c.b16 %v1869, %v1868
        %v1915 = vpack.c.b16 %v1871, %v1870
        %v1916 = vpack.c.b16 %v1873, %v1872
        %v1917 = vpack.c.b16 %v1875, %v1874
        %v1918 = vpack.c.b16 %v1877, %v1876
        %v1919 = vpack.c.b16 %v1879, %v1878
        %v1920 = vpack.c.b16 %v1881, %v1880
        %v1921 = vpack.c.b16 %v1883, %v1882
        %v1922 = vpack.c.b16 %v1885, %v1884
        %v1923 = vpack.c.b16 %v1887, %v1886
        %v1924 = vpack.c.b16 %v1889, %v1888
        %v1925 = vpack.c.b16 %v1891, %v1890
        %v1926 = vpack.c.b16 %v1893, %v1892
        %v1927 = vpack.c.b16 %v1895, %v1894
        %1960 = vmatpush.bf16.msra.mxu0 %v1903
        %1961 = vmatpush.bf16.msra.mxu0 %v1902
        %1962 = vmatpush.bf16.msra.mxu0 %v1901
        %1963 = vmatpush.bf16.msra.mxu0 %v1900
        %1964 = vmatpush.bf16.msra.mxu0 %v1899
        %1965 = vmatpush.bf16.msra.mxu0 %v1898
        %1966 = vmatpush.bf16.msra.mxu0 %v1897
        %1967 = vmatpush.bf16.msra.mxu0 %v1896
        %1968 = vmatmul.bf16.gmra.mxu0 %v1696
        %v1969 = vpop.f32.mrf.mxu0
        %v1970 = vadd.f32 %v1766, %v1969
        %v1971 = vpop.f32.mrf.mxu0
        %1972 = vdwg.mxu0
        %1973 = vmatpush.bf16.msra.mxu0 %v1911
        %1974 = vmatpush.bf16.msra.mxu0 %v1910
        %1975 = vmatpush.bf16.msra.mxu0 %v1909
        %1976 = vmatpush.bf16.msra.mxu0 %v1908
        %1977 = vmatpush.bf16.msra.mxu0 %v1907
        %1978 = vmatpush.bf16.msra.mxu0 %v1906
        %1979 = vmatpush.bf16.msra.mxu0 %v1905
        %1980 = vmatpush.bf16.msra.mxu0 %v1904
        %1981 = vmatmul.bf16.gmra.mxu0 %v1697
        %v1982 = vpop.f32.mrf.mxu0
        %v1983 = vadd.f32 %v1970, %v1982
        %v1984 = vpop.f32.mrf.mxu0
        %1985 = vdwg.mxu0
        %1986 = vmatpush.bf16.msra.mxu0 %v1919
        %1987 = vmatpush.bf16.msra.mxu0 %v1918
        %1988 = vmatpush.bf16.msra.mxu0 %v1917
        %1989 = vmatpush.bf16.msra.mxu0 %v1916
        %1990 = vmatpush.bf16.msra.mxu0 %v1915
        %1991 = vmatpush.bf16.msra.mxu0 %v1914
        %1992 = vmatpush.bf16.msra.mxu0 %v1913
        %1993 = vmatpush.bf16.msra.mxu0 %v1912
        %1994 = vmatmul.bf16.gmra.mxu0 %v1698
        %v1995 = vpop.f32.mrf.mxu0
        %v1996 = vadd.f32 %v1983, %v1995
        %v1997 = vpop.f32.mrf.mxu0
        %1998 = vdwg.mxu0
        %1999 = vmatpush.bf16.msra.mxu0 %v1927
        %2000 = vmatpush.bf16.msra.mxu0 %v1926
        %2001 = vmatpush.bf16.msra.mxu0 %v1925
        %2002 = vmatpush.bf16.msra.mxu0 %v1924
        %2003 = vmatpush.bf16.msra.mxu0 %v1923
        %2004 = vmatpush.bf16.msra.mxu0 %v1922
        %2005 = vmatpush.bf16.msra.mxu0 %v1921
        %2006 = vmatpush.bf16.msra.mxu0 %v1920
        %2007 = vmatmul.bf16.gmra.mxu0 %v1699
        %v2008 = vpop.f32.mrf.mxu0
        %v2009 = vadd.f32 %v1996, %v2008
        %v2010 = vpop.f32.mrf.mxu0
        %2011 = vdwg.mxu0
        %v2012 = vadd.f32 %v1326, %v2009
        %2013 = vst [vmem:[#allocation2] sm:$0xff] %v2012
        %p2014 = scmp.eq.s32.totalorder %s35, 1
        // Predicated region
        $region89: #{clip_forward.1} parent=83 // pred_check
          %p2015 = pneg %p2014
        $region90: #{clip_forward.1} parent=83 // pred_check_branch
          %2017 = sbr.rel (%p2015) target = $region92
        $region91: #{clip_forward.1} parent=83 // pred_region
          %v2018 = vld [vmem:[%s14] sm:$0x1]
          %v2019 = vld [vmem:[%s15] sm:$0x1]
          %2020 = vadd.xlane.f32.xlu0 %v2012
          %v2021 = vpop.xlane.xlu0 %2020
          %v2022 = vmul.f32 %v2021, %v747
          %v2023 = vsub.f32 %v2012, %v2022
          %v2024 = vmul.f32 %v2023, %v2023
          %2025 = vadd.xlane.f32.xlu0 %v2024
          %v2026 = vpop.xlane.xlu0 %2025
          %v2027 = vmul.f32 %v2026, %v747
          %v2028 = vadd.f32 %v2027, 1e-05
          %v2029 = vrsqrt.pop %v2028
          %v2030 = vmul.f32 %v2029, %v2028
          %v2031 = vmul.f32 %v2030, %v2029
          %v2032 = vmul.f32 0.5, %v2031
          %v2033 = vsub.f32 1.5, %v2032
          %v2034 = vmul.f32 %v2029, %v2033
          %vm2035 = vweird.f32 %v2028
          %vm2036 = vweird.f32 %v2029
          %vm2037 = vmor %vm2035, %vm2036
          %v2038 = vsel %vm2037, %v2029, %v2034
          %v2039 = vmul.f32 %v2023, %v2038
          %v2041 = vperm.slane %v2018, 0
          %v2043 = vmul.f32 %v2039, %v2041
          %v2045 = vperm.slane %v2019, 0
          %v2047 = vadd.f32 %v2043, %v2045
          %2048 = vst [vmem:[%s676] sm:$0xff] %v2047
        $region92: #{clip_forward.1} parent=83 // pred_fallthru
          _
        %s2049 = sand.u32 %s451, 1
        %s2050 = scalar_lea.sflag [#allocation4], %s2049
        %s2051 = sand.u32 %s451, 1
        %s2052 = smul.addr %s2051, 8
        %s2053 = scalar_lea.vmem [#allocation3], %s2052
        // Predicated region
        $region93: #{clip_forward.1} parent=83 // pred_check
          %p2054 = pneg %p461
        $region94: #{clip_forward.1} parent=83 // pred_check_branch
          %2056 = sbr.rel (%p2054) target = $region96
        $region95: #{clip_forward.1} parent=83 // pred_region
          %2058 = vsyncadd %s2050, 0
          %s2059 = smul.addr %s34, 8
          %s2060 = scalar_lea.hbm %s16, %s2059
          %s2062 = sshll.u32 %s2053, 4
          %s2063 = int_to_ptr.vmem [resolvable:$true] %s2062
          %s2064 = sshll.u32 %s2060, 4
          %s2065 = int_to_ptr.hbm [resolvable:$true] %s2064
          %2067 = dma.vmem_to_hbm [thread:$0]  %s2063, 128, %s2065, %s2050
        $region96: #{clip_forward.1} parent=83 // pred_fallthru
          _
      $region84: #{clip_forward.1} parent=5 // pred_fallthru
        _
      %p2068 = scmp.le.s32.totalorder 2, %s25
      // Predicated region
      $region97: #{clip_forward.1} parent=5 // pred_check
        %p2069 = pneg %p2068
      $region98: #{clip_forward.1} parent=5 // pred_check_branch
        %2071 = sbr.rel (%p2069) target = $region100
      $region99: #{clip_forward.1} parent=5 // pred_region
        %s2072 = ssub.s32 %s25, 2
        // Predicated region
        $region101: #{clip_forward.1} parent=99 // pred_check
          %p2073 = pneg %p467
        $region102: #{clip_forward.1} parent=99 // pred_check_branch
          %2075 = sbr.rel (%p2073) target = $region104
        $region103: #{clip_forward.1} parent=99 // pred_region
          %s2076 = sand.u32 %s452, 1
          %s2077 = scalar_lea.sflag [#allocation4], %s2076
          %s2078 = sand.u32 %s452, 1
          %s2079 = smul.addr %s2078, 8
          %s2080 = scalar_lea.vmem [#allocation3], %s2079
          %2082 = dma.done %s2077, 128
        $region104: #{clip_forward.1} parent=99 // pred_fallthru
          _
      $region100: #{clip_forward.1} parent=5 // pred_fallthru
        _
    $region6: #{clip_forward.1} parent=1 // loop_footer
      %s29 = sadd.s32 1, %s25
    $region7: #{clip_forward.1} parent=1 // loop_footer_branch
      %24 = sbr.rel target = $region3
    $region8: #{clip_forward.1} parent=1 // loop_exit
      _
    %2083 = vsyncpa [#allocation4], 1
    %s2084 = scalar_lea.sflag [#allocation4], 1
    %2085 = vsyncpa %s2084, 1

</llo_original>
